<compile_context>
chip_gen: v6e
topology: v6e:2x2x1
jax: 0.10.0
libtpu: 0.0.40
codegen_flags: <defaults>
</compile_context>

<pallas_src>
import jax
import jax.numpy as jnp
from jax import lax
from jax.experimental import pallas as pl
from jax.experimental.pallas import tpu as pltpu


def lstm_kernel(x_ref, wih0_ref, whh0_ref, b0_ref, w1_ref, b1_ref, wlin_ref,
                blin_ref, out_ref, g0_scr, h01_scr, h1hist_scr):
    """2-layer LSTM recurrence + deferred Linear + ReLU.

    x_ref:    (L*T, F)   flattened sequence-major input (row = l*T + t)
    wih0:     (F, 4H)    layer-0 input weights (transposed)
    whh0:     (H, 4H)    layer-0 recurrent weights (transposed)
    b0:       (1, 4H)    layer-0 combined bias (b_ih + b_hh)
    w1:       (2H, 4H)   fused layer-1 weights [W_ih1^T ; W_hh1^T]
    b1:       (1, 4H)    layer-1 combined bias
    wlin:     (1, H)     final linear weight
    blin:     (1,)       final linear bias (SMEM scalar)
    out_ref:  (L, T)     ReLU(linear(h1)) per (l, t)
    g0_scr:   (L*T, 4H)  hoisted layer-0 input projection (+ b0)
    h01_scr:  (T, 2H)    packed [h0 | h1] staging buffer for the fused matmul
    h1hist:   (L, T, H)  layer-1 hidden states for the deferred linear
    """
    L, T = out_ref.shape
    H = whh0_ref.shape[0]

    # ---- hoisted layer-0 input projection: one well-shaped matmul ----------
    g0_scr[...] = (jnp.dot(x_ref[...], wih0_ref[...],
                           preferred_element_type=jnp.float32) + b0_ref[...])

    whh0 = whh0_ref[...]          # (H, 4H)
    w1 = w1_ref[...]              # (2H, 4H)
    b1 = b1_ref[...]              # (1, 4H)

    # Packed [h0 | h1] staging buffer; zeros = PyTorch default initial state.
    h01_scr[...] = jnp.zeros(h01_scr.shape, jnp.float32)

    # Constant per-lane gate selectors (cell-candidate "g" gate is [2H, 3H)).
    lane = lax.broadcasted_iota(jnp.int32, (T, 4 * H), 1)
    is_g = jnp.logical_and(lane >= 2 * H, lane < 3 * H)
    gscale = jnp.where(is_g, 1.0, 0.5).astype(jnp.float32)   # tanh vs sigmoid
    goff = jnp.where(is_g, 0.0, 0.5).astype(jnp.float32)

    def gates(pre):
        # One full-vreg tanh gives all four activations:
        #   sigmoid(x) = 0.5 * (tanh(0.5 * x) + 1)   for i, f, o
        #   tanh(x)                                   for g
        th = jnp.tanh(pre * gscale)
        act = th * gscale + goff
        return (act[:, 0:H], act[:, H:2 * H],
                act[:, 2 * H:3 * H], act[:, 3 * H:4 * H])

    def step(l, carry):
        h0, c0, c1 = carry
        row = pl.multiple_of(l * T, T)

        # ----- layer 0 (input projection already in g0_scr) -----
        pre0 = g0_scr[pl.ds(row, T), :] + jnp.dot(
            h0, whh0, preferred_element_type=jnp.float32)          # (T, 4H)
        i0, f0, g0, o0 = gates(pre0)
        c0 = f0 * c0 + i0 * g0
        h0 = o0 * jnp.tanh(c0)

        # ----- layer 1: fused [h0_new | h1_prev] @ [W_ih1 ; W_hh1]^T -----
        h01_scr[:, 0:H] = h0
        pre1 = jnp.dot(h01_scr[...], w1,
                       preferred_element_type=jnp.float32) + b1     # (T, 4H)
        i1, f1, g1, o1 = gates(pre1)
        c1 = f1 * c1 + i1 * g1
        h1 = o1 * jnp.tanh(c1)
        h01_scr[:, H:2 * H] = h1          # becomes h1_prev for step l+1
        h1hist_scr[l] = h1                # saved for the deferred linear

        return (h0, c0, c1)

    zeros = jnp.zeros((T, H), jnp.float32)
    # Fully unrolled: lets the scheduler overlap independent halves of
    # consecutive steps (layer-1 of step l with layer-0 of step l+1).
    lax.fori_loop(0, L, step, (zeros, zeros, zeros), unroll=True)

    # ---- deferred Linear + ReLU; Dropout(0.2) is identity at inference -----
    w_lin = wlin_ref[...].reshape(1, 1, H)                          # (1,1,H)
    y = jnp.sum(h1hist_scr[...] * w_lin, axis=-1) + blin_ref[0]     # (L, T)
    out_ref[...] = jnp.maximum(y, 0.0)


def lstm_submodule_forward(x, params):
    """x: (B, N, F_in, T) float32 -> (B, N, T) float32."""
    B, N, Fin, T = x.shape
    L = B * N
    H = params["whh0_t"].shape[0]

    # (B,N,F,T) -> (B,N,T,F) -> (L*T, F): layout plumbing only (row = l*T + t).
    xp = jnp.transpose(x, (0, 1, 3, 2)).reshape(L * T, Fin).astype(jnp.float32)

    # Pre-concatenate layer-1 weights along K once: (2H, 4H).
    w1 = jnp.concatenate([params["wih1_t"], params["whh1_t"]], axis=0)

    out = pl.pallas_call(
        lstm_kernel,
        out_shape=jax.ShapeDtypeStruct((L, T), jnp.float32),
        grid_spec=pltpu.PrefetchScalarGridSpec(
            num_scalar_prefetch=0,
            grid=(1,),
            in_specs=[
                pl.BlockSpec((L * T, Fin), lambda i: (0, 0)),        # x (flat)
                pl.BlockSpec((Fin, 4 * H), lambda i: (0, 0)),        # W_ih0^T
                pl.BlockSpec((H, 4 * H), lambda i: (0, 0)),          # W_hh0^T
                pl.BlockSpec((1, 4 * H), lambda i: (0, 0)),          # b0
                pl.BlockSpec((2 * H, 4 * H), lambda i: (0, 0)),      # [Wih1;Whh1]^T
                pl.BlockSpec((1, 4 * H), lambda i: (0, 0)),          # b1
                pl.BlockSpec((1, H), lambda i: (0, 0)),              # W_lin
                pl.BlockSpec(memory_space=pltpu.MemorySpace.SMEM),   # b_lin
            ],
            out_specs=pl.BlockSpec((L, T), lambda i: (0, 0)),
            scratch_shapes=[
                pltpu.VMEM((L * T, 4 * H), jnp.float32),   # hoisted layer-0 gates
                pltpu.VMEM((T, 2 * H), jnp.float32),       # packed [h0 | h1]
                pltpu.VMEM((L, T, H), jnp.float32),        # h1 history
            ],
        ),
        # Toy shapes: one "arbitrary" grid step, everything resident in VMEM.
        # If L/T grow (v7x: 64 MiB VMEM, 2 TCs), tile L with a grid axis (guard
        # the state init with pl.when(program_id==0)) and add a "parallel"
        # T-tile axis so both TensorCores run independent batch slices.
        compiler_params=pltpu.CompilerParams(
            dimension_semantics=("arbitrary",)),
    )(
        xp,
        params["wih0_t"], params["whh0_t"], params["b0"],
        w1, params["b1"],
        params["wlin"], params["blin"],
    )
    return out.reshape(B, N, T)


def init_params(key, input_size, hidden_size, output_size):
    """Deterministic params mimicking PyTorch's uniform(-1/sqrt(H), 1/sqrt(H)) init."""
    H = hidden_size
    k = 1.0 / jnp.sqrt(jnp.float32(H))
    keys = jax.random.split(key, 10)

    def u(kk, shape):
        return jax.random.uniform(kk, shape, jnp.float32, -k, k)

    # PyTorch shapes: W_ih0 (4H, F), W_hh0 (4H, H), W_ih1 (4H, H), W_hh1 (4H, H)
    w_ih0 = u(keys[0], (4 * H, input_size))
    w_hh0 = u(keys[1], (4 * H, H))
    b_ih0 = u(keys[2], (4 * H,))
    b_hh0 = u(keys[3], (4 * H,))
    w_ih1 = u(keys[4], (4 * H, H))
    w_hh1 = u(keys[5], (4 * H, H))
    b_ih1 = u(keys[6], (4 * H,))
    b_hh1 = u(keys[7], (4 * H,))
    # Linear(H, output_size)
    w_lin = u(keys[8], (output_size, H))
    b_lin = u(keys[9], (output_size,))

    return {
        "wih0_t": w_ih0.T,                               # (F, 4H)
        "whh0_t": w_hh0.T,                               # (H, 4H)
        "b0": (b_ih0 + b_hh0).reshape(1, 4 * H),
        "wih1_t": w_ih1.T,                               # (H, 4H)
        "whh1_t": w_hh1.T,                               # (H, 4H)
        "b1": (b_ih1 + b_hh1).reshape(1, 4 * H),
        "wlin": w_lin,                                   # (1, H)   output_size=1
        "blin": b_lin,                                   # (1,)
    }


def lstm_submodule_ref(x, params):
    """Pure-JAX reference with identical semantics (correctness check)."""
    B, N, Fin, T = x.shape
    L = B * N
    H = params["whh0_t"].shape[0]
    xs = jnp.transpose(x, (0, 1, 3, 2)).reshape(L, T, Fin).astype(jnp.float32)

    def cell(xt, h, c, wih_t, whh_t, b):
        g = xt @ wih_t + h @ whh_t + b
        i = jax.nn.sigmoid(g[:, 0:H])
        f = jax.nn.sigmoid(g[:, H:2 * H])
        gg = jnp.tanh(g[:, 2 * H:3 * H])
        o = jax.nn.sigmoid(g[:, 3 * H:4 * H])
        c = f * c + i * gg
        h = o * jnp.tanh(c)
        return h, c

    def step(carry, xt):
        h0, c0, h1, c1 = carry
        h0, c0 = cell(xt, h0, c0, params["wih0_t"], params["whh0_t"], params["b0"])
        h1, c1 = cell(h0, h1, c1, params["wih1_t"], params["whh1_t"], params["b1"])
        y = jnp.maximum(h1 @ params["wlin"].T + params["blin"][0], 0.0)   # (T, 1)
        return (h0, c0, h1, c1), y[:, 0]

    z = jnp.zeros((T, H), jnp.float32)
    _, ys = lax.scan(step, (z, z, z, z), xs)           # (L, T)
    return ys.reshape(B, N, T)


if __name__ == "__main__":
    # Small shapes consistent with forward(): x is (B, N_nodes, F_in, T_in).
    B, N, Fin, T = 2, 4, 4, 8
    hidden_size, output_size = 32, 1

    key = jax.random.PRNGKey(0)
    kx, kp = jax.random.split(key)
    x = jax.random.normal(kx, (B, N, Fin, T), dtype=jnp.float32)
    params = init_params(kp, Fin, hidden_size, output_size)

    out = jax.block_until_ready(lstm_submodule_forward(x, params))
    assert out.shape == (B, N, T), out.shape
    assert bool(jnp.all(jnp.isfinite(out)))

    ref = jax.block_until_ready(lstm_submodule_ref(x, params))
    max_err = float(jnp.max(jnp.abs(out - ref)))
    # Loose tolerance: kernel MXU dots vs XLA reference dots may use different
    # internal f32 precisions; genuine bugs show up as O(0.1) errors.
    assert max_err < 2e-2, f"max abs error vs reference: {max_err}"

    print("KERNEL_OK")
</pallas_src>

<mosaic_0001>
module attributes {stable_mosaic.version = 11 : i64} {
  func.func @lstm_kernel(%arg0: i32, %arg1: memref<64x4xf32, #tpu.memory_space<vmem>>, %arg2: memref<4x128xf32, #tpu.memory_space<vmem>>, %arg3: memref<32x128xf32, #tpu.memory_space<vmem>>, %arg4: memref<1x128xf32, #tpu.memory_space<vmem>>, %arg5: memref<64x128xf32, #tpu.memory_space<vmem>>, %arg6: memref<1x128xf32, #tpu.memory_space<vmem>>, %arg7: memref<1x32xf32, #tpu.memory_space<vmem>>, %arg8: memref<1xf32, #tpu.memory_space<smem>>, %arg9: memref<8x8xf32, #tpu.memory_space<vmem>>, %arg10: memref<64x128xf32, #tpu.memory_space<vmem>>, %arg11: memref<8x64xf32, #tpu.memory_space<vmem>>, %arg12: memref<8x8x32xf32, #tpu.memory_space<vmem>>) attributes {dimension_semantics = [#tpu.dimension_semantics<arbitrary>], iteration_bounds = array<i64: 1>, scalar_prefetch = 0 : i64, scratch_operands = 3 : i64, tpu.core_type = #tpu.core_type<tc>, window_params = [{pipeline_mode = #tpu.pipeline_mode<synchronous>, transform_indices = @transform_0, window_bounds = array<i64: 64, 4>}, {pipeline_mode = #tpu.pipeline_mode<synchronous>, transform_indices = @transform_1, window_bounds = array<i64: 4, 128>}, {pipeline_mode = #tpu.pipeline_mode<synchronous>, transform_indices = @transform_2, window_bounds = array<i64: 32, 128>}, {pipeline_mode = #tpu.pipeline_mode<synchronous>, transform_indices = @transform_3, window_bounds = array<i64: 1, 128>}, {pipeline_mode = #tpu.pipeline_mode<synchronous>, transform_indices = @transform_4, window_bounds = array<i64: 64, 128>}, {pipeline_mode = #tpu.pipeline_mode<synchronous>, transform_indices = @transform_5, window_bounds = array<i64: 1, 128>}, {pipeline_mode = #tpu.pipeline_mode<synchronous>, transform_indices = @transform_6, window_bounds = array<i64: 1, 32>}, {transform_indices = @transform_7, window_bounds = array<i64: 1>}, {pipeline_mode = #tpu.pipeline_mode<synchronous>, transform_indices = @transform_8, window_bounds = array<i64: 8, 8>}]} {
    %c0 = arith.constant 0 : index
    %c0_0 = arith.constant 0 : index
    %0 = vector.load %arg1[%c0, %c0_0] : memref<64x4xf32, #tpu.memory_space<vmem>>, vector<64x4xf32>
    %c0_1 = arith.constant 0 : index
    %c0_2 = arith.constant 0 : index
    %1 = vector.load %arg2[%c0_1, %c0_2] : memref<4x128xf32, #tpu.memory_space<vmem>>, vector<4x128xf32>
    %cst = arith.constant dense<0.000000e+00> : vector<64x128xf32>
    %2 = tpu.matmul %0, %1, %cst {dimension_numbers = #tpu.dot_dimension_numbers<[1], [0], [0], [1], [0, 0, 1, 1], [], []>} : vector<64x4xf32>, vector<4x128xf32>, vector<64x128xf32> -> vector<64x128xf32>
    %c0_3 = arith.constant 0 : index
    %c0_4 = arith.constant 0 : index
    %3 = vector.load %arg4[%c0_3, %c0_4] : memref<1x128xf32, #tpu.memory_space<vmem>>, vector<1x128xf32>
    %4 = vector.broadcast %3 : vector<1x128xf32> to vector<64x128xf32>
    %5 = arith.addf %2, %4 : vector<64x128xf32>
    %c0_5 = arith.constant 0 : index
    %c0_6 = arith.constant 0 : index
    %6 = vector.load %arg10[%c0_5, %c0_6] : memref<64x128xf32, #tpu.memory_space<vmem>>, vector<64x128xf32>
    tpu.vector_store %arg10[%c0_5, %c0_6], %5 {strides = array<i32>} : memref<64x128xf32, #tpu.memory_space<vmem>>, vector<64x128xf32>,
    %c0_7 = arith.constant 0 : index
    %c0_8 = arith.constant 0 : index
    %7 = vector.load %arg3[%c0_7, %c0_8] : memref<32x128xf32, #tpu.memory_space<vmem>>, vector<32x128xf32>
    %c0_9 = arith.constant 0 : index
    %c0_10 = arith.constant 0 : index
    %8 = vector.load %arg5[%c0_9, %c0_10] : memref<64x128xf32, #tpu.memory_space<vmem>>, vector<64x128xf32>
    %c0_11 = arith.constant 0 : index
    %c0_12 = arith.constant 0 : index
    %9 = vector.load %arg6[%c0_11, %c0_12] : memref<1x128xf32, #tpu.memory_space<vmem>>, vector<1x128xf32>
    %cst_13 = arith.constant 0.000000e+00 : f32
    %10 = vector.broadcast %cst_13 : f32 to vector<8x64xf32>
    %c0_14 = arith.constant 0 : index
    %c0_15 = arith.constant 0 : index
    %11 = vector.load %arg11[%c0_14, %c0_15] : memref<8x64xf32, #tpu.memory_space<vmem>>, vector<8x64xf32>
    tpu.vector_store %arg11[%c0_14, %c0_15], %10 {strides = array<i32>} : memref<8x64xf32, #tpu.memory_space<vmem>>, vector<8x64xf32>,
    %12 = tpu.iota {dimensions = array<i32: 1>} : vector<8x128xi32>
    %c64_i32 = arith.constant 64 : i32
    %13 = vector.broadcast %c64_i32 : i32 to vector<8x128xi32>
    %14 = arith.cmpi sge, %12, %13 : vector<8x128xi32>
    %c96_i32 = arith.constant 96 : i32
    %15 = vector.broadcast %c96_i32 : i32 to vector<8x128xi32>
    %16 = arith.cmpi slt, %12, %15 : vector<8x128xi32>
    %17 = arith.andi %14, %16 : vector<8x128xi1>
    %cst_16 = arith.constant 1.000000e+00 : f32
    %cst_17 = arith.constant 5.000000e-01 : f32
    %18 = vector.broadcast %cst_16 : f32 to vector<8x128xf32>
    %19 = vector.broadcast %cst_17 : f32 to vector<8x128xf32>
    %20 = arith.select %17, %18, %19 : vector<8x128xi1>, vector<8x128xf32>
    %cst_18 = arith.constant 0.000000e+00 : f32
    %cst_19 = arith.constant 5.000000e-01 : f32
    %21 = vector.broadcast %cst_18 : f32 to vector<8x128xf32>
    %22 = vector.broadcast %cst_19 : f32 to vector<8x128xf32>
    %23 = arith.select %17, %21, %22 : vector<8x128xi1>, vector<8x128xf32>
    %cst_20 = arith.constant 0.000000e+00 : f32
    %24 = vector.broadcast %cst_20 : f32 to vector<8x32xf32>
    %c0_i32 = arith.constant 0 : i32
    %c8_i32 = arith.constant 8 : i32
    %25 = arith.muli %c0_i32, %c8_i32 : i32
    %26 = tpu.assume_multiple %25, 8 : i32
    %27 = arith.index_cast %26 : i32 to index
    %c0_21 = arith.constant 0 : index
    %28 = vector.load %arg10[%27, %c0_21] : memref<64x128xf32, #tpu.memory_space<vmem>>, vector<8x128xf32>
    %cst_22 = arith.constant dense<0.000000e+00> : vector<8x128xf32>
    %29 = tpu.matmul %24, %7, %cst_22 {dimension_numbers = #tpu.dot_dimension_numbers<[1], [0], [0], [1], [0, 0, 1, 1], [], []>} : vector<8x32xf32>, vector<32x128xf32>, vector<8x128xf32> -> vector<8x128xf32>
    %30 = arith.addf %28, %29 : vector<8x128xf32>
    %31 = arith.mulf %30, %20 : vector<8x128xf32>
    %32 = math.tanh %31 : vector<8x128xf32>
    %33 = arith.mulf %32, %20 : vector<8x128xf32>
    %34 = arith.addf %33, %23 : vector<8x128xf32>
    %35 = vector.extract_strided_slice %34 {offsets = [0, 0], sizes = [8, 32], strides = [1, 1]} : vector<8x128xf32> to vector<8x32xf32>
    %36 = vector.extract_strided_slice %34 {offsets = [0, 32], sizes = [8, 32], strides = [1, 1]} : vector<8x128xf32> to vector<8x32xf32>
    %37 = vector.extract_strided_slice %34 {offsets = [0, 64], sizes = [8, 32], strides = [1, 1]} : vector<8x128xf32> to vector<8x32xf32>
    %38 = vector.extract_strided_slice %34 {offsets = [0, 96], sizes = [8, 32], strides = [1, 1]} : vector<8x128xf32> to vector<8x32xf32>
    %39 = arith.mulf %36, %24 : vector<8x32xf32>
    %40 = arith.mulf %35, %37 : vector<8x32xf32>
    %41 = arith.addf %39, %40 : vector<8x32xf32>
    %42 = math.tanh %41 : vector<8x32xf32>
    %43 = arith.mulf %38, %42 : vector<8x32xf32>
    %c0_23 = arith.constant 0 : index
    %c0_24 = arith.constant 0 : index
    %44 = vector.load %arg11[%c0_23, %c0_24] : memref<8x64xf32, #tpu.memory_space<vmem>>, vector<8x32xf32>
    tpu.vector_store %arg11[%c0_23, %c0_24], %43 {strides = array<i32>} : memref<8x64xf32, #tpu.memory_space<vmem>>, vector<8x32xf32>,
    %c0_25 = arith.constant 0 : index
    %c0_26 = arith.constant 0 : index
    %45 = vector.load %arg11[%c0_25, %c0_26] : memref<8x64xf32, #tpu.memory_space<vmem>>, vector<8x64xf32>
    %cst_27 = arith.constant dense<0.000000e+00> : vector<8x128xf32>
    %46 = tpu.matmul %45, %8, %cst_27 {dimension_numbers = #tpu.dot_dimension_numbers<[1], [0], [0], [1], [0, 0, 1, 1], [], []>} : vector<8x64xf32>, vector<64x128xf32>, vector<8x128xf32> -> vector<8x128xf32>
    %47 = vector.broadcast %9 : vector<1x128xf32> to vector<8x128xf32>
    %48 = arith.addf %46, %47 : vector<8x128xf32>
    %49 = arith.mulf %48, %20 : vector<8x128xf32>
    %50 = math.tanh %49 : vector<8x128xf32>
    %51 = arith.mulf %50, %20 : vector<8x128xf32>
    %52 = arith.addf %51, %23 : vector<8x128xf32>
    %53 = vector.extract_strided_slice %52 {offsets = [0, 0], sizes = [8, 32], strides = [1, 1]} : vector<8x128xf32> to vector<8x32xf32>
    %54 = vector.extract_strided_slice %52 {offsets = [0, 32], sizes = [8, 32], strides = [1, 1]} : vector<8x128xf32> to vector<8x32xf32>
    %55 = vector.extract_strided_slice %52 {offsets = [0, 64], sizes = [8, 32], strides = [1, 1]} : vector<8x128xf32> to vector<8x32xf32>
    %56 = vector.extract_strided_slice %52 {offsets = [0, 96], sizes = [8, 32], strides = [1, 1]} : vector<8x128xf32> to vector<8x32xf32>
    %57 = arith.mulf %54, %24 : vector<8x32xf32>
    %58 = arith.mulf %53, %55 : vector<8x32xf32>
    %59 = arith.addf %57, %58 : vector<8x32xf32>
    %60 = math.tanh %59 : vector<8x32xf32>
    %61 = arith.mulf %56, %60 : vector<8x32xf32>
    %c0_28 = arith.constant 0 : index
    %c32 = arith.constant 32 : index
    %62 = vector.load %arg11[%c0_28, %c32] : memref<8x64xf32, #tpu.memory_space<vmem>>, vector<8x32xf32>
    tpu.vector_store %arg11[%c0_28, %c32], %61 {strides = array<i32>} : memref<8x64xf32, #tpu.memory_space<vmem>>, vector<8x32xf32>,
    %63 = arith.index_cast %c0_i32 : i32 to index
    %c0_29 = arith.constant 0 : index
    %c0_30 = arith.constant 0 : index
    %64 = vector.load %arg12[%63, %c0_29, %c0_30] : memref<8x8x32xf32, #tpu.memory_space<vmem>>, vector<1x8x32xf32>
    %65 = vector.shape_cast %64 : vector<1x8x32xf32> to vector<8x32xf32>
    %66 = vector.shape_cast %61 : vector<8x32xf32> to vector<1x8x32xf32>
    tpu.vector_store %arg12[%63, %c0_29, %c0_30], %66 {strides = array<i32>} : memref<8x8x32xf32, #tpu.memory_space<vmem>>, vector<1x8x32xf32>,
    %c1_i32 = arith.constant 1 : i32
    %c8_i32_31 = arith.constant 8 : i32
    %67 = arith.muli %c1_i32, %c8_i32_31 : i32
    %68 = tpu.assume_multiple %67, 8 : i32
    %69 = arith.index_cast %68 : i32 to index
    %c0_32 = arith.constant 0 : index
    %70 = vector.load %arg10[%69, %c0_32] : memref<64x128xf32, #tpu.memory_space<vmem>>, vector<8x128xf32>
    %cst_33 = arith.constant dense<0.000000e+00> : vector<8x128xf32>
    %71 = tpu.matmul %43, %7, %cst_33 {dimension_numbers = #tpu.dot_dimension_numbers<[1], [0], [0], [1], [0, 0, 1, 1], [], []>} : vector<8x32xf32>, vector<32x128xf32>, vector<8x128xf32> -> vector<8x128xf32>
    %72 = arith.addf %70, %71 : vector<8x128xf32>
    %73 = arith.mulf %72, %20 : vector<8x128xf32>
    %74 = math.tanh %73 : vector<8x128xf32>
    %75 = arith.mulf %74, %20 : vector<8x128xf32>
    %76 = arith.addf %75, %23 : vector<8x128xf32>
    %77 = vector.extract_strided_slice %76 {offsets = [0, 0], sizes = [8, 32], strides = [1, 1]} : vector<8x128xf32> to vector<8x32xf32>
    %78 = vector.extract_strided_slice %76 {offsets = [0, 32], sizes = [8, 32], strides = [1, 1]} : vector<8x128xf32> to vector<8x32xf32>
    %79 = vector.extract_strided_slice %76 {offsets = [0, 64], sizes = [8, 32], strides = [1, 1]} : vector<8x128xf32> to vector<8x32xf32>
    %80 = vector.extract_strided_slice %76 {offsets = [0, 96], sizes = [8, 32], strides = [1, 1]} : vector<8x128xf32> to vector<8x32xf32>
    %81 = arith.mulf %78, %41 : vector<8x32xf32>
    %82 = arith.mulf %77, %79 : vector<8x32xf32>
    %83 = arith.addf %81, %82 : vector<8x32xf32>
    %84 = math.tanh %83 : vector<8x32xf32>
    %85 = arith.mulf %80, %84 : vector<8x32xf32>
    %c0_34 = arith.constant 0 : index
    %c0_35 = arith.constant 0 : index
    %86 = vector.load %arg11[%c0_34, %c0_35] : memref<8x64xf32, #tpu.memory_space<vmem>>, vector<8x32xf32>
    tpu.vector_store %arg11[%c0_34, %c0_35], %85 {strides = array<i32>} : memref<8x64xf32, #tpu.memory_space<vmem>>, vector<8x32xf32>,
    %c0_36 = arith.constant 0 : index
    %c0_37 = arith.constant 0 : index
    %87 = vector.load %arg11[%c0_36, %c0_37] : memref<8x64xf32, #tpu.memory_space<vmem>>, vector<8x64xf32>
    %cst_38 = arith.constant dense<0.000000e+00> : vector<8x128xf32>
    %88 = tpu.matmul %87, %8, %cst_38 {dimension_numbers = #tpu.dot_dimension_numbers<[1], [0], [0], [1], [0, 0, 1, 1], [], []>} : vector<8x64xf32>, vector<64x128xf32>, vector<8x128xf32> -> vector<8x128xf32>
    %89 = vector.broadcast %9 : vector<1x128xf32> to vector<8x128xf32>
    %90 = arith.addf %88, %89 : vector<8x128xf32>
    %91 = arith.mulf %90, %20 : vector<8x128xf32>
    %92 = math.tanh %91 : vector<8x128xf32>
    %93 = arith.mulf %92, %20 : vector<8x128xf32>
    %94 = arith.addf %93, %23 : vector<8x128xf32>
    %95 = vector.extract_strided_slice %94 {offsets = [0, 0], sizes = [8, 32], strides = [1, 1]} : vector<8x128xf32> to vector<8x32xf32>
    %96 = vector.extract_strided_slice %94 {offsets = [0, 32], sizes = [8, 32], strides = [1, 1]} : vector<8x128xf32> to vector<8x32xf32>
    %97 = vector.extract_strided_slice %94 {offsets = [0, 64], sizes = [8, 32], strides = [1, 1]} : vector<8x128xf32> to vector<8x32xf32>
    %98 = vector.extract_strided_slice %94 {offsets = [0, 96], sizes = [8, 32], strides = [1, 1]} : vector<8x128xf32> to vector<8x32xf32>
    %99 = arith.mulf %96, %59 : vector<8x32xf32>
    %100 = arith.mulf %95, %97 : vector<8x32xf32>
    %101 = arith.addf %99, %100 : vector<8x32xf32>
    %102 = math.tanh %101 : vector<8x32xf32>
    %103 = arith.mulf %98, %102 : vector<8x32xf32>
    %c0_39 = arith.constant 0 : index
    %c32_40 = arith.constant 32 : index
    %104 = vector.load %arg11[%c0_39, %c32_40] : memref<8x64xf32, #tpu.memory_space<vmem>>, vector<8x32xf32>
    tpu.vector_store %arg11[%c0_39, %c32_40], %103 {strides = array<i32>} : memref<8x64xf32, #tpu.memory_space<vmem>>, vector<8x32xf32>,
    %105 = arith.index_cast %c1_i32 : i32 to index
    %c0_41 = arith.constant 0 : index
    %c0_42 = arith.constant 0 : index
    %106 = vector.load %arg12[%105, %c0_41, %c0_42] : memref<8x8x32xf32, #tpu.memory_space<vmem>>, vector<1x8x32xf32>
    %107 = vector.shape_cast %106 : vector<1x8x32xf32> to vector<8x32xf32>
    %108 = vector.shape_cast %103 : vector<8x32xf32> to vector<1x8x32xf32>
    tpu.vector_store %arg12[%105, %c0_41, %c0_42], %108 {strides = array<i32>} : memref<8x8x32xf32, #tpu.memory_space<vmem>>, vector<1x8x32xf32>,
    %c2_i32 = arith.constant 2 : i32
    %c8_i32_43 = arith.constant 8 : i32
    %109 = arith.muli %c2_i32, %c8_i32_43 : i32
    %110 = tpu.assume_multiple %109, 8 : i32
    %111 = arith.index_cast %110 : i32 to index
    %c0_44 = arith.constant 0 : index
    %112 = vector.load %arg10[%111, %c0_44] : memref<64x128xf32, #tpu.memory_space<vmem>>, vector<8x128xf32>
    %cst_45 = arith.constant dense<0.000000e+00> : vector<8x128xf32>
    %113 = tpu.matmul %85, %7, %cst_45 {dimension_numbers = #tpu.dot_dimension_numbers<[1], [0], [0], [1], [0, 0, 1, 1], [], []>} : vector<8x32xf32>, vector<32x128xf32>, vector<8x128xf32> -> vector<8x128xf32>
    %114 = arith.addf %112, %113 : vector<8x128xf32>
    %115 = arith.mulf %114, %20 : vector<8x128xf32>
    %116 = math.tanh %115 : vector<8x128xf32>
    %117 = arith.mulf %116, %20 : vector<8x128xf32>
    %118 = arith.addf %117, %23 : vector<8x128xf32>
    %119 = vector.extract_strided_slice %118 {offsets = [0, 0], sizes = [8, 32], strides = [1, 1]} : vector<8x128xf32> to vector<8x32xf32>
    %120 = vector.extract_strided_slice %118 {offsets = [0, 32], sizes = [8, 32], strides = [1, 1]} : vector<8x128xf32> to vector<8x32xf32>
    %121 = vector.extract_strided_slice %118 {offsets = [0, 64], sizes = [8, 32], strides = [1, 1]} : vector<8x128xf32> to vector<8x32xf32>
    %122 = vector.extract_strided_slice %118 {offsets = [0, 96], sizes = [8, 32], strides = [1, 1]} : vector<8x128xf32> to vector<8x32xf32>
    %123 = arith.mulf %120, %83 : vector<8x32xf32>
    %124 = arith.mulf %119, %121 : vector<8x32xf32>
    %125 = arith.addf %123, %124 : vector<8x32xf32>
    %126 = math.tanh %125 : vector<8x32xf32>
    %127 = arith.mulf %122, %126 : vector<8x32xf32>
    %c0_46 = arith.constant 0 : index
    %c0_47 = arith.constant 0 : index
    %128 = vector.load %arg11[%c0_46, %c0_47] : memref<8x64xf32, #tpu.memory_space<vmem>>, vector<8x32xf32>
    tpu.vector_store %arg11[%c0_46, %c0_47], %127 {strides = array<i32>} : memref<8x64xf32, #tpu.memory_space<vmem>>, vector<8x32xf32>,
    %c0_48 = arith.constant 0 : index
    %c0_49 = arith.constant 0 : index
    %129 = vector.load %arg11[%c0_48, %c0_49] : memref<8x64xf32, #tpu.memory_space<vmem>>, vector<8x64xf32>
    %cst_50 = arith.constant dense<0.000000e+00> : vector<8x128xf32>
    %130 = tpu.matmul %129, %8, %cst_50 {dimension_numbers = #tpu.dot_dimension_numbers<[1], [0], [0], [1], [0, 0, 1, 1], [], []>} : vector<8x64xf32>, vector<64x128xf32>, vector<8x128xf32> -> vector<8x128xf32>
    %131 = vector.broadcast %9 : vector<1x128xf32> to vector<8x128xf32>
    %132 = arith.addf %130, %131 : vector<8x128xf32>
    %133 = arith.mulf %132, %20 : vector<8x128xf32>
    %134 = math.tanh %133 : vector<8x128xf32>
    %135 = arith.mulf %134, %20 : vector<8x128xf32>
    %136 = arith.addf %135, %23 : vector<8x128xf32>
    %137 = vector.extract_strided_slice %136 {offsets = [0, 0], sizes = [8, 32], strides = [1, 1]} : vector<8x128xf32> to vector<8x32xf32>
    %138 = vector.extract_strided_slice %136 {offsets = [0, 32], sizes = [8, 32], strides = [1, 1]} : vector<8x128xf32> to vector<8x32xf32>
    %139 = vector.extract_strided_slice %136 {offsets = [0, 64], sizes = [8, 32], strides = [1, 1]} : vector<8x128xf32> to vector<8x32xf32>
    %140 = vector.extract_strided_slice %136 {offsets = [0, 96], sizes = [8, 32], strides = [1, 1]} : vector<8x128xf32> to vector<8x32xf32>
    %141 = arith.mulf %138, %101 : vector<8x32xf32>
    %142 = arith.mulf %137, %139 : vector<8x32xf32>
    %143 = arith.addf %141, %142 : vector<8x32xf32>
    %144 = math.tanh %143 : vector<8x32xf32>
    %145 = arith.mulf %140, %144 : vector<8x32xf32>
    %c0_51 = arith.constant 0 : index
    %c32_52 = arith.constant 32 : index
    %146 = vector.load %arg11[%c0_51, %c32_52] : memref<8x64xf32, #tpu.memory_space<vmem>>, vector<8x32xf32>
    tpu.vector_store %arg11[%c0_51, %c32_52], %145 {strides = array<i32>} : memref<8x64xf32, #tpu.memory_space<vmem>>, vector<8x32xf32>,
    %147 = arith.index_cast %c2_i32 : i32 to index
    %c0_53 = arith.constant 0 : index
    %c0_54 = arith.constant 0 : index
    %148 = vector.load %arg12[%147, %c0_53, %c0_54] : memref<8x8x32xf32, #tpu.memory_space<vmem>>, vector<1x8x32xf32>
    %149 = vector.shape_cast %148 : vector<1x8x32xf32> to vector<8x32xf32>
    %150 = vector.shape_cast %145 : vector<8x32xf32> to vector<1x8x32xf32>
    tpu.vector_store %arg12[%147, %c0_53, %c0_54], %150 {strides = array<i32>} : memref<8x8x32xf32, #tpu.memory_space<vmem>>, vector<1x8x32xf32>,
    %c3_i32 = arith.constant 3 : i32
    %c8_i32_55 = arith.constant 8 : i32
    %151 = arith.muli %c3_i32, %c8_i32_55 : i32
    %152 = tpu.assume_multiple %151, 8 : i32
    %153 = arith.index_cast %152 : i32 to index
    %c0_56 = arith.constant 0 : index
    %154 = vector.load %arg10[%153, %c0_56] : memref<64x128xf32, #tpu.memory_space<vmem>>, vector<8x128xf32>
    %cst_57 = arith.constant dense<0.000000e+00> : vector<8x128xf32>
    %155 = tpu.matmul %127, %7, %cst_57 {dimension_numbers = #tpu.dot_dimension_numbers<[1], [0], [0], [1], [0, 0, 1, 1], [], []>} : vector<8x32xf32>, vector<32x128xf32>, vector<8x128xf32> -> vector<8x128xf32>
    %156 = arith.addf %154, %155 : vector<8x128xf32>
    %157 = arith.mulf %156, %20 : vector<8x128xf32>
    %158 = math.tanh %157 : vector<8x128xf32>
    %159 = arith.mulf %158, %20 : vector<8x128xf32>
    %160 = arith.addf %159, %23 : vector<8x128xf32>
    %161 = vector.extract_strided_slice %160 {offsets = [0, 0], sizes = [8, 32], strides = [1, 1]} : vector<8x128xf32> to vector<8x32xf32>
    %162 = vector.extract_strided_slice %160 {offsets = [0, 32], sizes = [8, 32], strides = [1, 1]} : vector<8x128xf32> to vector<8x32xf32>
    %163 = vector.extract_strided_slice %160 {offsets = [0, 64], sizes = [8, 32], strides = [1, 1]} : vector<8x128xf32> to vector<8x32xf32>
    %164 = vector.extract_strided_slice %160 {offsets = [0, 96], sizes = [8, 32], strides = [1, 1]} : vector<8x128xf32> to vector<8x32xf32>
    %165 = arith.mulf %162, %125 : vector<8x32xf32>
    %166 = arith.mulf %161, %163 : vector<8x32xf32>
    %167 = arith.addf %165, %166 : vector<8x32xf32>
    %168 = math.tanh %167 : vector<8x32xf32>
    %169 = arith.mulf %164, %168 : vector<8x32xf32>
    %c0_58 = arith.constant 0 : index
    %c0_59 = arith.constant 0 : index
    %170 = vector.load %arg11[%c0_58, %c0_59] : memref<8x64xf32, #tpu.memory_space<vmem>>, vector<8x32xf32>
    tpu.vector_store %arg11[%c0_58, %c0_59], %169 {strides = array<i32>} : memref<8x64xf32, #tpu.memory_space<vmem>>, vector<8x32xf32>,
    %c0_60 = arith.constant 0 : index
    %c0_61 = arith.constant 0 : index
    %171 = vector.load %arg11[%c0_60, %c0_61] : memref<8x64xf32, #tpu.memory_space<vmem>>, vector<8x64xf32>
    %cst_62 = arith.constant dense<0.000000e+00> : vector<8x128xf32>
    %172 = tpu.matmul %171, %8, %cst_62 {dimension_numbers = #tpu.dot_dimension_numbers<[1], [0], [0], [1], [0, 0, 1, 1], [], []>} : vector<8x64xf32>, vector<64x128xf32>, vector<8x128xf32> -> vector<8x128xf32>
    %173 = vector.broadcast %9 : vector<1x128xf32> to vector<8x128xf32>
    %174 = arith.addf %172, %173 : vector<8x128xf32>
    %175 = arith.mulf %174, %20 : vector<8x128xf32>
    %176 = math.tanh %175 : vector<8x128xf32>
    %177 = arith.mulf %176, %20 : vector<8x128xf32>
    %178 = arith.addf %177, %23 : vector<8x128xf32>
    %179 = vector.extract_strided_slice %178 {offsets = [0, 0], sizes = [8, 32], strides = [1, 1]} : vector<8x128xf32> to vector<8x32xf32>
    %180 = vector.extract_strided_slice %178 {offsets = [0, 32], sizes = [8, 32], strides = [1, 1]} : vector<8x128xf32> to vector<8x32xf32>
    %181 = vector.extract_strided_slice %178 {offsets = [0, 64], sizes = [8, 32], strides = [1, 1]} : vector<8x128xf32> to vector<8x32xf32>
    %182 = vector.extract_strided_slice %178 {offsets = [0, 96], sizes = [8, 32], strides = [1, 1]} : vector<8x128xf32> to vector<8x32xf32>
    %183 = arith.mulf %180, %143 : vector<8x32xf32>
    %184 = arith.mulf %179, %181 : vector<8x32xf32>
    %185 = arith.addf %183, %184 : vector<8x32xf32>
    %186 = math.tanh %185 : vector<8x32xf32>
    %187 = arith.mulf %182, %186 : vector<8x32xf32>
    %c0_63 = arith.constant 0 : index
    %c32_64 = arith.constant 32 : index
    %188 = vector.load %arg11[%c0_63, %c32_64] : memref<8x64xf32, #tpu.memory_space<vmem>>, vector<8x32xf32>
    tpu.vector_store %arg11[%c0_63, %c32_64], %187 {strides = array<i32>} : memref<8x64xf32, #tpu.memory_space<vmem>>, vector<8x32xf32>,
    %189 = arith.index_cast %c3_i32 : i32 to index
    %c0_65 = arith.constant 0 : index
    %c0_66 = arith.constant 0 : index
    %190 = vector.load %arg12[%189, %c0_65, %c0_66] : memref<8x8x32xf32, #tpu.memory_space<vmem>>, vector<1x8x32xf32>
    %191 = vector.shape_cast %190 : vector<1x8x32xf32> to vector<8x32xf32>
    %192 = vector.shape_cast %187 : vector<8x32xf32> to vector<1x8x32xf32>
    tpu.vector_store %arg12[%189, %c0_65, %c0_66], %192 {strides = array<i32>} : memref<8x8x32xf32, #tpu.memory_space<vmem>>, vector<1x8x32xf32>,
    %c4_i32 = arith.constant 4 : i32
    %c8_i32_67 = arith.constant 8 : i32
    %193 = arith.muli %c4_i32, %c8_i32_67 : i32
    %194 = tpu.assume_multiple %193, 8 : i32
    %195 = arith.index_cast %194 : i32 to index
    %c0_68 = arith.constant 0 : index
    %196 = vector.load %arg10[%195, %c0_68] : memref<64x128xf32, #tpu.memory_space<vmem>>, vector<8x128xf32>
    %cst_69 = arith.constant dense<0.000000e+00> : vector<8x128xf32>
    %197 = tpu.matmul %169, %7, %cst_69 {dimension_numbers = #tpu.dot_dimension_numbers<[1], [0], [0], [1], [0, 0, 1, 1], [], []>} : vector<8x32xf32>, vector<32x128xf32>, vector<8x128xf32> -> vector<8x128xf32>
    %198 = arith.addf %196, %197 : vector<8x128xf32>
    %199 = arith.mulf %198, %20 : vector<8x128xf32>
    %200 = math.tanh %199 : vector<8x128xf32>
    %201 = arith.mulf %200, %20 : vector<8x128xf32>
    %202 = arith.addf %201, %23 : vector<8x128xf32>
    %203 = vector.extract_strided_slice %202 {offsets = [0, 0], sizes = [8, 32], strides = [1, 1]} : vector<8x128xf32> to vector<8x32xf32>
    %204 = vector.extract_strided_slice %202 {offsets = [0, 32], sizes = [8, 32], strides = [1, 1]} : vector<8x128xf32> to vector<8x32xf32>
    %205 = vector.extract_strided_slice %202 {offsets = [0, 64], sizes = [8, 32], strides = [1, 1]} : vector<8x128xf32> to vector<8x32xf32>
    %206 = vector.extract_strided_slice %202 {offsets = [0, 96], sizes = [8, 32], strides = [1, 1]} : vector<8x128xf32> to vector<8x32xf32>
    %207 = arith.mulf %204, %167 : vector<8x32xf32>
    %208 = arith.mulf %203, %205 : vector<8x32xf32>
    %209 = arith.addf %207, %208 : vector<8x32xf32>
    %210 = math.tanh %209 : vector<8x32xf32>
    %211 = arith.mulf %206, %210 : vector<8x32xf32>
    %c0_70 = arith.constant 0 : index
    %c0_71 = arith.constant 0 : index
    %212 = vector.load %arg11[%c0_70, %c0_71] : memref<8x64xf32, #tpu.memory_space<vmem>>, vector<8x32xf32>
    tpu.vector_store %arg11[%c0_70, %c0_71], %211 {strides = array<i32>} : memref<8x64xf32, #tpu.memory_space<vmem>>, vector<8x32xf32>,
    %c0_72 = arith.constant 0 : index
    %c0_73 = arith.constant 0 : index
    %213 = vector.load %arg11[%c0_72, %c0_73] : memref<8x64xf32, #tpu.memory_space<vmem>>, vector<8x64xf32>
    %cst_74 = arith.constant dense<0.000000e+00> : vector<8x128xf32>
    %214 = tpu.matmul %213, %8, %cst_74 {dimension_numbers = #tpu.dot_dimension_numbers<[1], [0], [0], [1], [0, 0, 1, 1], [], []>} : vector<8x64xf32>, vector<64x128xf32>, vector<8x128xf32> -> vector<8x128xf32>
    %215 = vector.broadcast %9 : vector<1x128xf32> to vector<8x128xf32>
    %216 = arith.addf %214, %215 : vector<8x128xf32>
    %217 = arith.mulf %216, %20 : vector<8x128xf32>
    %218 = math.tanh %217 : vector<8x128xf32>
    %219 = arith.mulf %218, %20 : vector<8x128xf32>
    %220 = arith.addf %219, %23 : vector<8x128xf32>
    %221 = vector.extract_strided_slice %220 {offsets = [0, 0], sizes = [8, 32], strides = [1, 1]} : vector<8x128xf32> to vector<8x32xf32>
    %222 = vector.extract_strided_slice %220 {offsets = [0, 32], sizes = [8, 32], strides = [1, 1]} : vector<8x128xf32> to vector<8x32xf32>
    %223 = vector.extract_strided_slice %220 {offsets = [0, 64], sizes = [8, 32], strides = [1, 1]} : vector<8x128xf32> to vector<8x32xf32>
    %224 = vector.extract_strided_slice %220 {offsets = [0, 96], sizes = [8, 32], strides = [1, 1]} : vector<8x128xf32> to vector<8x32xf32>
    %225 = arith.mulf %222, %185 : vector<8x32xf32>
    %226 = arith.mulf %221, %223 : vector<8x32xf32>
    %227 = arith.addf %225, %226 : vector<8x32xf32>
    %228 = math.tanh %227 : vector<8x32xf32>
    %229 = arith.mulf %224, %228 : vector<8x32xf32>
    %c0_75 = arith.constant 0 : index
    %c32_76 = arith.constant 32 : index
    %230 = vector.load %arg11[%c0_75, %c32_76] : memref<8x64xf32, #tpu.memory_space<vmem>>, vector<8x32xf32>
    tpu.vector_store %arg11[%c0_75, %c32_76], %229 {strides = array<i32>} : memref<8x64xf32, #tpu.memory_space<vmem>>, vector<8x32xf32>,
    %231 = arith.index_cast %c4_i32 : i32 to index
    %c0_77 = arith.constant 0 : index
    %c0_78 = arith.constant 0 : index
    %232 = vector.load %arg12[%231, %c0_77, %c0_78] : memref<8x8x32xf32, #tpu.memory_space<vmem>>, vector<1x8x32xf32>
    %233 = vector.shape_cast %232 : vector<1x8x32xf32> to vector<8x32xf32>
    %234 = vector.shape_cast %229 : vector<8x32xf32> to vector<1x8x32xf32>
    tpu.vector_store %arg12[%231, %c0_77, %c0_78], %234 {strides = array<i32>} : memref<8x8x32xf32, #tpu.memory_space<vmem>>, vector<1x8x32xf32>,
    %c5_i32 = arith.constant 5 : i32
    %c8_i32_79 = arith.constant 8 : i32
    %235 = arith.muli %c5_i32, %c8_i32_79 : i32
    %236 = tpu.assume_multiple %235, 8 : i32
    %237 = arith.index_cast %236 : i32 to index
    %c0_80 = arith.constant 0 : index
    %238 = vector.load %arg10[%237, %c0_80] : memref<64x128xf32, #tpu.memory_space<vmem>>, vector<8x128xf32>
    %cst_81 = arith.constant dense<0.000000e+00> : vector<8x128xf32>
    %239 = tpu.matmul %211, %7, %cst_81 {dimension_numbers = #tpu.dot_dimension_numbers<[1], [0], [0], [1], [0, 0, 1, 1], [], []>} : vector<8x32xf32>, vector<32x128xf32>, vector<8x128xf32> -> vector<8x128xf32>
    %240 = arith.addf %238, %239 : vector<8x128xf32>
    %241 = arith.mulf %240, %20 : vector<8x128xf32>
    %242 = math.tanh %241 : vector<8x128xf32>
    %243 = arith.mulf %242, %20 : vector<8x128xf32>
    %244 = arith.addf %243, %23 : vector<8x128xf32>
    %245 = vector.extract_strided_slice %244 {offsets = [0, 0], sizes = [8, 32], strides = [1, 1]} : vector<8x128xf32> to vector<8x32xf32>
    %246 = vector.extract_strided_slice %244 {offsets = [0, 32], sizes = [8, 32], strides = [1, 1]} : vector<8x128xf32> to vector<8x32xf32>
    %247 = vector.extract_strided_slice %244 {offsets = [0, 64], sizes = [8, 32], strides = [1, 1]} : vector<8x128xf32> to vector<8x32xf32>
    %248 = vector.extract_strided_slice %244 {offsets = [0, 96], sizes = [8, 32], strides = [1, 1]} : vector<8x128xf32> to vector<8x32xf32>
    %249 = arith.mulf %246, %209 : vector<8x32xf32>
    %250 = arith.mulf %245, %247 : vector<8x32xf32>
    %251 = arith.addf %249, %250 : vector<8x32xf32>
    %252 = math.tanh %251 : vector<8x32xf32>
    %253 = arith.mulf %248, %252 : vector<8x32xf32>
    %c0_82 = arith.constant 0 : index
    %c0_83 = arith.constant 0 : index
    %254 = vector.load %arg11[%c0_82, %c0_83] : memref<8x64xf32, #tpu.memory_space<vmem>>, vector<8x32xf32>
    tpu.vector_store %arg11[%c0_82, %c0_83], %253 {strides = array<i32>} : memref<8x64xf32, #tpu.memory_space<vmem>>, vector<8x32xf32>,
    %c0_84 = arith.constant 0 : index
    %c0_85 = arith.constant 0 : index
    %255 = vector.load %arg11[%c0_84, %c0_85] : memref<8x64xf32, #tpu.memory_space<vmem>>, vector<8x64xf32>
    %cst_86 = arith.constant dense<0.000000e+00> : vector<8x128xf32>
    %256 = tpu.matmul %255, %8, %cst_86 {dimension_numbers = #tpu.dot_dimension_numbers<[1], [0], [0], [1], [0, 0, 1, 1], [], []>} : vector<8x64xf32>, vector<64x128xf32>, vector<8x128xf32> -> vector<8x128xf32>
    %257 = vector.broadcast %9 : vector<1x128xf32> to vector<8x128xf32>
    %258 = arith.addf %256, %257 : vector<8x128xf32>
    %259 = arith.mulf %258, %20 : vector<8x128xf32>
    %260 = math.tanh %259 : vector<8x128xf32>
    %261 = arith.mulf %260, %20 : vector<8x128xf32>
    %262 = arith.addf %261, %23 : vector<8x128xf32>
    %263 = vector.extract_strided_slice %262 {offsets = [0, 0], sizes = [8, 32], strides = [1, 1]} : vector<8x128xf32> to vector<8x32xf32>
    %264 = vector.extract_strided_slice %262 {offsets = [0, 32], sizes = [8, 32], strides = [1, 1]} : vector<8x128xf32> to vector<8x32xf32>
    %265 = vector.extract_strided_slice %262 {offsets = [0, 64], sizes = [8, 32], strides = [1, 1]} : vector<8x128xf32> to vector<8x32xf32>
    %266 = vector.extract_strided_slice %262 {offsets = [0, 96], sizes = [8, 32], strides = [1, 1]} : vector<8x128xf32> to vector<8x32xf32>
    %267 = arith.mulf %264, %227 : vector<8x32xf32>
    %268 = arith.mulf %263, %265 : vector<8x32xf32>
    %269 = arith.addf %267, %268 : vector<8x32xf32>
    %270 = math.tanh %269 : vector<8x32xf32>
    %271 = arith.mulf %266, %270 : vector<8x32xf32>
    %c0_87 = arith.constant 0 : index
    %c32_88 = arith.constant 32 : index
    %272 = vector.load %arg11[%c0_87, %c32_88] : memref<8x64xf32, #tpu.memory_space<vmem>>, vector<8x32xf32>
    tpu.vector_store %arg11[%c0_87, %c32_88], %271 {strides = array<i32>} : memref<8x64xf32, #tpu.memory_space<vmem>>, vector<8x32xf32>,
    %273 = arith.index_cast %c5_i32 : i32 to index
    %c0_89 = arith.constant 0 : index
    %c0_90 = arith.constant 0 : index
    %274 = vector.load %arg12[%273, %c0_89, %c0_90] : memref<8x8x32xf32, #tpu.memory_space<vmem>>, vector<1x8x32xf32>
    %275 = vector.shape_cast %274 : vector<1x8x32xf32> to vector<8x32xf32>
    %276 = vector.shape_cast %271 : vector<8x32xf32> to vector<1x8x32xf32>
    tpu.vector_store %arg12[%273, %c0_89, %c0_90], %276 {strides = array<i32>} : memref<8x8x32xf32, #tpu.memory_space<vmem>>, vector<1x8x32xf32>,
    %c6_i32 = arith.constant 6 : i32
    %c8_i32_91 = arith.constant 8 : i32
    %277 = arith.muli %c6_i32, %c8_i32_91 : i32
    %278 = tpu.assume_multiple %277, 8 : i32
    %279 = arith.index_cast %278 : i32 to index
    %c0_92 = arith.constant 0 : index
    %280 = vector.load %arg10[%279, %c0_92] : memref<64x128xf32, #tpu.memory_space<vmem>>, vector<8x128xf32>
    %cst_93 = arith.constant dense<0.000000e+00> : vector<8x128xf32>
    %281 = tpu.matmul %253, %7, %cst_93 {dimension_numbers = #tpu.dot_dimension_numbers<[1], [0], [0], [1], [0, 0, 1, 1], [], []>} : vector<8x32xf32>, vector<32x128xf32>, vector<8x128xf32> -> vector<8x128xf32>
    %282 = arith.addf %280, %281 : vector<8x128xf32>
    %283 = arith.mulf %282, %20 : vector<8x128xf32>
    %284 = math.tanh %283 : vector<8x128xf32>
    %285 = arith.mulf %284, %20 : vector<8x128xf32>
    %286 = arith.addf %285, %23 : vector<8x128xf32>
    %287 = vector.extract_strided_slice %286 {offsets = [0, 0], sizes = [8, 32], strides = [1, 1]} : vector<8x128xf32> to vector<8x32xf32>
    %288 = vector.extract_strided_slice %286 {offsets = [0, 32], sizes = [8, 32], strides = [1, 1]} : vector<8x128xf32> to vector<8x32xf32>
    %289 = vector.extract_strided_slice %286 {offsets = [0, 64], sizes = [8, 32], strides = [1, 1]} : vector<8x128xf32> to vector<8x32xf32>
    %290 = vector.extract_strided_slice %286 {offsets = [0, 96], sizes = [8, 32], strides = [1, 1]} : vector<8x128xf32> to vector<8x32xf32>
    %291 = arith.mulf %288, %251 : vector<8x32xf32>
    %292 = arith.mulf %287, %289 : vector<8x32xf32>
    %293 = arith.addf %291, %292 : vector<8x32xf32>
    %294 = math.tanh %293 : vector<8x32xf32>
    %295 = arith.mulf %290, %294 : vector<8x32xf32>
    %c0_94 = arith.constant 0 : index
    %c0_95 = arith.constant 0 : index
    %296 = vector.load %arg11[%c0_94, %c0_95] : memref<8x64xf32, #tpu.memory_space<vmem>>, vector<8x32xf32>
    tpu.vector_store %arg11[%c0_94, %c0_95], %295 {strides = array<i32>} : memref<8x64xf32, #tpu.memory_space<vmem>>, vector<8x32xf32>,
    %c0_96 = arith.constant 0 : index
    %c0_97 = arith.constant 0 : index
    %297 = vector.load %arg11[%c0_96, %c0_97] : memref<8x64xf32, #tpu.memory_space<vmem>>, vector<8x64xf32>
    %cst_98 = arith.constant dense<0.000000e+00> : vector<8x128xf32>
    %298 = tpu.matmul %297, %8, %cst_98 {dimension_numbers = #tpu.dot_dimension_numbers<[1], [0], [0], [1], [0, 0, 1, 1], [], []>} : vector<8x64xf32>, vector<64x128xf32>, vector<8x128xf32> -> vector<8x128xf32>
    %299 = vector.broadcast %9 : vector<1x128xf32> to vector<8x128xf32>
    %300 = arith.addf %298, %299 : vector<8x128xf32>
    %301 = arith.mulf %300, %20 : vector<8x128xf32>
    %302 = math.tanh %301 : vector<8x128xf32>
    %303 = arith.mulf %302, %20 : vector<8x128xf32>
    %304 = arith.addf %303, %23 : vector<8x128xf32>
    %305 = vector.extract_strided_slice %304 {offsets = [0, 0], sizes = [8, 32], strides = [1, 1]} : vector<8x128xf32> to vector<8x32xf32>
    %306 = vector.extract_strided_slice %304 {offsets = [0, 32], sizes = [8, 32], strides = [1, 1]} : vector<8x128xf32> to vector<8x32xf32>
    %307 = vector.extract_strided_slice %304 {offsets = [0, 64], sizes = [8, 32], strides = [1, 1]} : vector<8x128xf32> to vector<8x32xf32>
    %308 = vector.extract_strided_slice %304 {offsets = [0, 96], sizes = [8, 32], strides = [1, 1]} : vector<8x128xf32> to vector<8x32xf32>
    %309 = arith.mulf %306, %269 : vector<8x32xf32>
    %310 = arith.mulf %305, %307 : vector<8x32xf32>
    %311 = arith.addf %309, %310 : vector<8x32xf32>
    %312 = math.tanh %311 : vector<8x32xf32>
    %313 = arith.mulf %308, %312 : vector<8x32xf32>
    %c0_99 = arith.constant 0 : index
    %c32_100 = arith.constant 32 : index
    %314 = vector.load %arg11[%c0_99, %c32_100] : memref<8x64xf32, #tpu.memory_space<vmem>>, vector<8x32xf32>
    tpu.vector_store %arg11[%c0_99, %c32_100], %313 {strides = array<i32>} : memref<8x64xf32, #tpu.memory_space<vmem>>, vector<8x32xf32>,
    %315 = arith.index_cast %c6_i32 : i32 to index
    %c0_101 = arith.constant 0 : index
    %c0_102 = arith.constant 0 : index
    %316 = vector.load %arg12[%315, %c0_101, %c0_102] : memref<8x8x32xf32, #tpu.memory_space<vmem>>, vector<1x8x32xf32>
    %317 = vector.shape_cast %316 : vector<1x8x32xf32> to vector<8x32xf32>
    %318 = vector.shape_cast %313 : vector<8x32xf32> to vector<1x8x32xf32>
    tpu.vector_store %arg12[%315, %c0_101, %c0_102], %318 {strides = array<i32>} : memref<8x8x32xf32, #tpu.memory_space<vmem>>, vector<1x8x32xf32>,
    %c7_i32 = arith.constant 7 : i32
    %c8_i32_103 = arith.constant 8 : i32
    %319 = arith.muli %c7_i32, %c8_i32_103 : i32
    %320 = tpu.assume_multiple %319, 8 : i32
    %321 = arith.index_cast %320 : i32 to index
    %c0_104 = arith.constant 0 : index
    %322 = vector.load %arg10[%321, %c0_104] : memref<64x128xf32, #tpu.memory_space<vmem>>, vector<8x128xf32>
    %cst_105 = arith.constant dense<0.000000e+00> : vector<8x128xf32>
    %323 = tpu.matmul %295, %7, %cst_105 {dimension_numbers = #tpu.dot_dimension_numbers<[1], [0], [0], [1], [0, 0, 1, 1], [], []>} : vector<8x32xf32>, vector<32x128xf32>, vector<8x128xf32> -> vector<8x128xf32>
    %324 = arith.addf %322, %323 : vector<8x128xf32>
    %325 = arith.mulf %324, %20 : vector<8x128xf32>
    %326 = math.tanh %325 : vector<8x128xf32>
    %327 = arith.mulf %326, %20 : vector<8x128xf32>
    %328 = arith.addf %327, %23 : vector<8x128xf32>
    %329 = vector.extract_strided_slice %328 {offsets = [0, 0], sizes = [8, 32], strides = [1, 1]} : vector<8x128xf32> to vector<8x32xf32>
    %330 = vector.extract_strided_slice %328 {offsets = [0, 32], sizes = [8, 32], strides = [1, 1]} : vector<8x128xf32> to vector<8x32xf32>
    %331 = vector.extract_strided_slice %328 {offsets = [0, 64], sizes = [8, 32], strides = [1, 1]} : vector<8x128xf32> to vector<8x32xf32>
    %332 = vector.extract_strided_slice %328 {offsets = [0, 96], sizes = [8, 32], strides = [1, 1]} : vector<8x128xf32> to vector<8x32xf32>
    %333 = arith.mulf %330, %293 : vector<8x32xf32>
    %334 = arith.mulf %329, %331 : vector<8x32xf32>
    %335 = arith.addf %333, %334 : vector<8x32xf32>
    %336 = math.tanh %335 : vector<8x32xf32>
    %337 = arith.mulf %332, %336 : vector<8x32xf32>
    %c0_106 = arith.constant 0 : index
    %c0_107 = arith.constant 0 : index
    %338 = vector.load %arg11[%c0_106, %c0_107] : memref<8x64xf32, #tpu.memory_space<vmem>>, vector<8x32xf32>
    tpu.vector_store %arg11[%c0_106, %c0_107], %337 {strides = array<i32>} : memref<8x64xf32, #tpu.memory_space<vmem>>, vector<8x32xf32>,
    %c0_108 = arith.constant 0 : index
    %c0_109 = arith.constant 0 : index
    %339 = vector.load %arg11[%c0_108, %c0_109] : memref<8x64xf32, #tpu.memory_space<vmem>>, vector<8x64xf32>
    %cst_110 = arith.constant dense<0.000000e+00> : vector<8x128xf32>
    %340 = tpu.matmul %339, %8, %cst_110 {dimension_numbers = #tpu.dot_dimension_numbers<[1], [0], [0], [1], [0, 0, 1, 1], [], []>} : vector<8x64xf32>, vector<64x128xf32>, vector<8x128xf32> -> vector<8x128xf32>
    %341 = vector.broadcast %9 : vector<1x128xf32> to vector<8x128xf32>
    %342 = arith.addf %340, %341 : vector<8x128xf32>
    %343 = arith.mulf %342, %20 : vector<8x128xf32>
    %344 = math.tanh %343 : vector<8x128xf32>
    %345 = arith.mulf %344, %20 : vector<8x128xf32>
    %346 = arith.addf %345, %23 : vector<8x128xf32>
    %347 = vector.extract_strided_slice %346 {offsets = [0, 0], sizes = [8, 32], strides = [1, 1]} : vector<8x128xf32> to vector<8x32xf32>
    %348 = vector.extract_strided_slice %346 {offsets = [0, 32], sizes = [8, 32], strides = [1, 1]} : vector<8x128xf32> to vector<8x32xf32>
    %349 = vector.extract_strided_slice %346 {offsets = [0, 64], sizes = [8, 32], strides = [1, 1]} : vector<8x128xf32> to vector<8x32xf32>
    %350 = vector.extract_strided_slice %346 {offsets = [0, 96], sizes = [8, 32], strides = [1, 1]} : vector<8x128xf32> to vector<8x32xf32>
    %351 = arith.mulf %348, %311 : vector<8x32xf32>
    %352 = arith.mulf %347, %349 : vector<8x32xf32>
    %353 = arith.addf %351, %352 : vector<8x32xf32>
    %354 = math.tanh %353 : vector<8x32xf32>
    %355 = arith.mulf %350, %354 : vector<8x32xf32>
    %c0_111 = arith.constant 0 : index
    %c32_112 = arith.constant 32 : index
    %356 = vector.load %arg11[%c0_111, %c32_112] : memref<8x64xf32, #tpu.memory_space<vmem>>, vector<8x32xf32>
    tpu.vector_store %arg11[%c0_111, %c32_112], %355 {strides = array<i32>} : memref<8x64xf32, #tpu.memory_space<vmem>>, vector<8x32xf32>,
    %357 = arith.index_cast %c7_i32 : i32 to index
    %c0_113 = arith.constant 0 : index
    %c0_114 = arith.constant 0 : index
    %358 = vector.load %arg12[%357, %c0_113, %c0_114] : memref<8x8x32xf32, #tpu.memory_space<vmem>>, vector<1x8x32xf32>
    %359 = vector.shape_cast %358 : vector<1x8x32xf32> to vector<8x32xf32>
    %360 = vector.shape_cast %355 : vector<8x32xf32> to vector<1x8x32xf32>
    tpu.vector_store %arg12[%357, %c0_113, %c0_114], %360 {strides = array<i32>} : memref<8x8x32xf32, #tpu.memory_space<vmem>>, vector<1x8x32xf32>,
    %c8_i32_115 = arith.constant 8 : i32
    %c0_116 = arith.constant 0 : index
    %c0_117 = arith.constant 0 : index
    %361 = vector.load %arg7[%c0_116, %c0_117] : memref<1x32xf32, #tpu.memory_space<vmem>>, vector<1x32xf32>
    %362 = vector.shape_cast %361 : vector<1x32xf32> to vector<1x1x32xf32>
    %c0_118 = arith.constant 0 : index
    %c0_119 = arith.constant 0 : index
    %c0_120 = arith.constant 0 : index
    %363 = vector.load %arg12[%c0_118, %c0_119, %c0_120] : memref<8x8x32xf32, #tpu.memory_space<vmem>>, vector<8x8x32xf32>
    %364 = vector.broadcast %362 : vector<1x1x32xf32> to vector<8x8x32xf32>
    %365 = arith.mulf %363, %364 : vector<8x8x32xf32>
    %cst_121 = arith.constant dense<0.000000e+00> : vector<8x8xf32>
    %366 = vector.multi_reduction <add>, %365, %cst_121 [2] : vector<8x8x32xf32> to vector<8x8xf32>
    %c0_122 = arith.constant 0 : index
    %367 = memref.load %arg8[%c0_122] : memref<1xf32, #tpu.memory_space<smem>>
    %368 = vector.broadcast %367 : f32 to vector<8x8xf32>
    %369 = arith.addf %366, %368 : vector<8x8xf32>
    %cst_123 = arith.constant 0.000000e+00 : f32
    %370 = vector.broadcast %cst_123 : f32 to vector<8x8xf32>
    %371 = arith.maximumf %369, %370 : vector<8x8xf32>
    %c0_124 = arith.constant 0 : index
    %c0_125 = arith.constant 0 : index
    %372 = vector.load %arg9[%c0_124, %c0_125] : memref<8x8xf32, #tpu.memory_space<vmem>>, vector<8x8xf32>
    tpu.vector_store %arg9[%c0_124, %c0_125], %371 {strides = array<i32>} : memref<8x8xf32, #tpu.memory_space<vmem>>, vector<8x8xf32>,
    return
  }
  func.func @transform_0(%arg0: i32) -> (i32, i32) {
    %c0_i32 = arith.constant 0 : i32
    %c0_i32_0 = arith.constant 0 : i32
    %c0_i32_1 = arith.constant 0 : i32
    return %c0_i32, %c0_i32_0 : i32, i32
  }
  func.func @transform_1(%arg0: i32) -> (i32, i32) {
    %c0_i32 = arith.constant 0 : i32
    %c0_i32_0 = arith.constant 0 : i32
    %c0_i32_1 = arith.constant 0 : i32
    return %c0_i32, %c0_i32_0 : i32, i32
  }
  func.func @transform_2(%arg0: i32) -> (i32, i32) {
    %c0_i32 = arith.constant 0 : i32
    %c0_i32_0 = arith.constant 0 : i32
    %c0_i32_1 = arith.constant 0 : i32
    return %c0_i32, %c0_i32_0 : i32, i32
  }
  func.func @transform_3(%arg0: i32) -> (i32, i32) {
    %c0_i32 = arith.constant 0 : i32
    %c0_i32_0 = arith.constant 0 : i32
    %c0_i32_1 = arith.constant 0 : i32
    return %c0_i32, %c0_i32_0 : i32, i32
  }
  func.func @transform_4(%arg0: i32) -> (i32, i32) {
    %c0_i32 = arith.constant 0 : i32
    %c0_i32_0 = arith.constant 0 : i32
    %c0_i32_1 = arith.constant 0 : i32
    return %c0_i32, %c0_i32_0 : i32, i32
  }
  func.func @transform_5(%arg0: i32) -> (i32, i32) {
    %c0_i32 = arith.constant 0 : i32
    %c0_i32_0 = arith.constant 0 : i32
    %c0_i32_1 = arith.constant 0 : i32
    return %c0_i32, %c0_i32_0 : i32, i32
  }
  func.func @transform_6(%arg0: i32) -> (i32, i32) {
    %c0_i32 = arith.constant 0 : i32
    %c0_i32_0 = arith.constant 0 : i32
    %c0_i32_1 = arith.constant 0 : i32
    return %c0_i32, %c0_i32_0 : i32, i32
  }
  func.func @transform_7(%arg0: i32) -> i32 {
    %c0_i32 = arith.constant 0 : i32
    %c0_i32_0 = arith.constant 0 : i32
    return %c0_i32 : i32
  }
  func.func @transform_8(%arg0: i32) -> (i32, i32) {
    %c0_i32 = arith.constant 0 : i32
    %c0_i32_0 = arith.constant 0 : i32
    %c0_i32_1 = arith.constant 0 : i32
    return %c0_i32, %c0_i32_0 : i32, i32
  }
}

</mosaic_0001>

<llo_original>
// kernel: tpu_custom_call.1
$region0: #{tpu_custom_call.1}
  #allocation0 [shape = 'u32[]', space=smem, size = 0x4, offset = 0x4, fixed_abs, tag = 'smem constant byte address 0x4 - core index']
  #allocation1 [shape = 'u32[144,128]{1,0:T(1,128)}', space=vmem, size = 0x12000, scoped, tag = 'internal scratch']
  #allocation2 [shape = 'f32[64,128]{1,0:T(8,128)}', space=vmem, size = 0x8000, scoped, tag = 'scratch operand']
  #allocation3 [shape = 'f32[8,64]{1,0:T(8,128)}', space=vmem, size = 0x1000, scoped, tag = 'scratch operand']
  #allocation4 [shape = 'f32[8,8,32]{2,1,0:T(8,128)}', space=vmem, size = 0x8000, scoped, tag = 'scratch operand']
  #allocation5 [shape = 'f32[1]{0:T(128)S(6)}', space=smem, size = 0x200, scoped, tag = 'scoped memory for tpu_custom_call.1']
  %s0 = inlined_call_operand.vmem [shape: f32[64,4], index: 0, kind: input, shape index: {}]
  %s1 = inlined_call_operand.vmem [shape: f32[4,128], index: 1, kind: input, shape index: {}]
  %s2 = inlined_call_operand.hbm [shape: f32[32,128], index: 2, kind: input, shape index: {}]
  %s3 = inlined_call_operand.vmem [shape: f32[1,128], index: 3, kind: input, shape index: {}]
  %s4 = inlined_call_operand.vmem [shape: f32[64,128], index: 4, kind: input, shape index: {}]
  %s5 = inlined_call_operand.vmem [shape: f32[1,128], index: 5, kind: input, shape index: {}]
  %s6 = inlined_call_operand.vmem [shape: f32[1,32], index: 6, kind: input, shape index: {}]
  %s7 = inlined_call_operand.<no memory space> [shape: f32[1], index: 7, kind: input, shape index: {}]
  %s8 = inlined_call_operand.hbm [shape: f32[8,8], index: 8, kind: output, shape index: {}]
  %s9 = sld [smem:[#allocation0]]
  $region46: #{tpu_custom_call.1} parent=0
    _
  %s11 = ssub.s32 1, %s9
  %s12 = scalar_select 0, %s11, %s9
  %13 = sst [smem:[#allocation5]] %s7
  $region1: #{tpu_custom_call.1} parent=0
    #allocation6 [shape = 'u8[16384]{0}', space=vmem, size = 0x4000, scoped, tag = 'input window, operand 2, single buffered']
    #allocation7 [shape = 's32[1]{0}', space=sflag, size = 0x4, scoped, tag = 'scoped memory for tpu_custom_call.1']
    #allocation8 [shape = 's32[1]{0}', space=sflag, size = 0x4, scoped, tag = 'scoped memory for tpu_custom_call.1']
    #allocation9 [shape = 'u8[4096]{0}', space=vmem, size = 0x1000, scoped, tag = 'output window, operand 0, single buffered']
    %14 = vsyncpa [#allocation7], 0
    %15 = vsyncpa [#allocation8], 0
    // Predicated region
    $region2: #{tpu_custom_call.1} parent=1 // pred_check
      _
    $region3: #{tpu_custom_call.1} parent=1 // pred_check_branch
      %17 = sbr.rel (0) target = $region5
    $region4: #{tpu_custom_call.1} parent=1 // pred_region
      _
    $region5: #{tpu_custom_call.1} parent=1 // pred_fallthru
      _
    // Predicated region
    $region6: #{tpu_custom_call.1} parent=1 // pred_check
      _
    $region7: #{tpu_custom_call.1} parent=1 // pred_check_branch
      %19 = sbr.rel (0) target = $region9
    $region8: #{tpu_custom_call.1} parent=1 // pred_region
      _
    $region9: #{tpu_custom_call.1} parent=1 // pred_fallthru
      _
    // Predicated region
    $region10: #{tpu_custom_call.1} parent=1 // pred_check
      _
    $region11: #{tpu_custom_call.1} parent=1 // pred_check_branch
      %21 = sbr.rel (0) target = $region13
    $region12: #{tpu_custom_call.1} parent=1 // pred_region
      %s23 = ssub.s32 512, 512
      %24 = vsyncadd [#allocation7], %s23
      %s25 = sshll.u32 [#allocation6], 4
      %s26 = int_to_ptr.vmem [resolvable:$true] %s25
      %31 = dma.hbm_to_vmem [thread:$0]  %s2, 512, %s26, [#allocation7], 128, 128, 8
    $region13: #{tpu_custom_call.1} parent=1 // pred_fallthru
      _
    // Predicated region
    $region14: #{tpu_custom_call.1} parent=1 // pred_check
      _
    $region15: #{tpu_custom_call.1} parent=1 // pred_check_branch
      %33 = sbr.rel (0) target = $region17
    $region16: #{tpu_custom_call.1} parent=1 // pred_region
      _
    $region17: #{tpu_custom_call.1} parent=1 // pred_fallthru
      _
    // Predicated region
    $region18: #{tpu_custom_call.1} parent=1 // pred_check
      _
    $region19: #{tpu_custom_call.1} parent=1 // pred_check_branch
      %35 = sbr.rel (0) target = $region21
    $region20: #{tpu_custom_call.1} parent=1 // pred_region
      _
    $region21: #{tpu_custom_call.1} parent=1 // pred_fallthru
      _
    // Predicated region
    $region22: #{tpu_custom_call.1} parent=1 // pred_check
      _
    $region23: #{tpu_custom_call.1} parent=1 // pred_check_branch
      %37 = sbr.rel (0) target = $region25
    $region24: #{tpu_custom_call.1} parent=1 // pred_region
      _
    $region25: #{tpu_custom_call.1} parent=1 // pred_fallthru
      _
    // Predicated region
    $region26: #{tpu_custom_call.1} parent=1 // pred_check
      _
    $region27: #{tpu_custom_call.1} parent=1 // pred_check_branch
      %39 = sbr.rel (0) target = $region29
    $region28: #{tpu_custom_call.1} parent=1 // pred_region
      _
    $region29: #{tpu_custom_call.1} parent=1 // pred_fallthru
      _
    // Predicated region
    $region30: #{tpu_custom_call.1} parent=1 // pred_check
      _
    $region31: #{tpu_custom_call.1} parent=1 // pred_check_branch
      %41 = sbr.rel (0) target = $region33
    $region32: #{tpu_custom_call.1} parent=1 // pred_region
      _
    $region33: #{tpu_custom_call.1} parent=1 // pred_fallthru
      _
    // Predicated region
    $region34: #{tpu_custom_call.1} parent=1 // pred_check
      _
    $region35: #{tpu_custom_call.1} parent=1 // pred_check_branch
      %43 = sbr.rel (0) target = $region37
    $region36: #{tpu_custom_call.1} parent=1 // pred_region
      %44 = dma.done [#allocation7], 512
    $region37: #{tpu_custom_call.1} parent=1 // pred_fallthru
      _
    %v45 = vld [vmem:[%s0] sm:$0xff]
    %v46 = vld [vmem:[%s0 + $0x8] sm:$0xff]
    %v47 = vld [vmem:[%s0 + $0x10] sm:$0xff]
    %v48 = vld [vmem:[%s0 + $0x18] sm:$0xff]
    %v49 = vld [vmem:[%s0 + $0x20] sm:$0xff]
    %v50 = vld [vmem:[%s0 + $0x28] sm:$0xff]
    %v51 = vld [vmem:[%s0 + $0x30] sm:$0xff]
    %v52 = vld [vmem:[%s0 + $0x38] sm:$0xff]
    %v53 = vld [vmem:[%s1] sm:$0xf]
    %v54 = vld [vmem:[%s3] sm:$0x1]
    %v56 = vlaneseq
    %v57 = vshrl.u32 %v56, 7
    %v58 = vsub.s32 0, %v57
    %v59 = vrot.slane %v54, %v58
    %vm61 = vcmask 31744
    %v63 = vsel %vm61, %v45, 0
    %v66 = vsel %vm61, %v46, 0
    %v69 = vsel %vm61, %v47, 0
    %v72 = vsel %vm61, %v48, 0
    %v75 = vsel %vm61, %v49, 0
    %v78 = vsel %vm61, %v50, 0
    %v81 = vsel %vm61, %v51, 0
    %v84 = vsel %vm61, %v52, 0
    %vm86 = vcmask 1043456
    %v88 = vsel %vm86, %v53, 0
    %90 = vmatprep.subr.mxu0 0.0
    %91 = vmatpush1.msra.mxu0 0.0
    %92 = vmatprep.subr.mxu0 0.0
    %93 = vmatpush1.msra.mxu0 0.0
    %94 = vmatprep.subr.mxu0 0.0
    %95 = vmatpush1.msra.mxu0 0.0
    %96 = vmatprep.subr.mxu0 0.0
    %97 = vmatpush1.msra.mxu0 0.0
    %98 = vmatprep.subr.mxu0 0.0
    %99 = vmatpush1.msra.mxu0 0.0
    %100 = vmatprep.subr.mxu0 0.0
    %101 = vmatpush1.msra.mxu0 0.0
    %102 = vmatprep.subr.mxu0 0.0
    %103 = vmatpush1.msra.mxu0 0.0
    %104 = vmatprep.subr.mxu0 0.0
    %105 = vmatpush1.msra.mxu0 0.0
    %106 = vmatprep.subr.mxu0 0.0
    %107 = vmatpush1.msra.mxu0 0.0
    %108 = vmatprep.subr.mxu0 0.0
    %109 = vmatpush1.msra.mxu0 0.0
    %110 = vmatprep.subr.mxu0 0.0
    %111 = vmatpush1.msra.mxu0 0.0
    %112 = vmatprep.subr.mxu0 0.0
    %113 = vmatpush1.msra.mxu0 0.0
    %114 = vmatprep.subr.mxu0 0.0
    %115 = vmatpush1.msra.mxu0 0.0
    %116 = vmatprep.subr.mxu0 0.0
    %117 = vmatpush1.msra.mxu0 0.0
    %118 = vmatprep.subr.mxu0 0.0
    %119 = vmatpush1.msra.mxu0 0.0
    %120 = vmatprep.subr.mxu0 0.0
    %121 = vmatpush1.msra.mxu0 %v88
    %122 = vmatprep.subr.mxu0 0.0
    %123 = vmatpush2.msra.mxu0 0.0
    %124 = vmatprep.subr.mxu0 0.0
    %125 = vmatpush2.msra.mxu0 0.0
    %126 = vmatprep.subr.mxu0 0.0
    %127 = vmatpush2.msra.mxu0 0.0
    %128 = vmatprep.subr.mxu0 0.0
    %129 = vmatpush2.msra.mxu0 0.0
    %130 = vmatprep.subr.mxu0 0.0
    %131 = vmatpush2.msra.mxu0 0.0
    %132 = vmatprep.subr.mxu0 0.0
    %133 = vmatpush2.msra.mxu0 0.0
    %134 = vmatprep.subr.mxu0 0.0
    %135 = vmatpush2.msra.mxu0 0.0
    %136 = vmatprep.subr.mxu0 0.0
    %137 = vmatpush2.msra.mxu0 0.0
    %138 = vmatprep.subr.mxu0 0.0
    %139 = vmatpush2.msra.mxu0 0.0
    %140 = vmatprep.subr.mxu0 0.0
    %141 = vmatpush2.msra.mxu0 0.0
    %142 = vmatprep.subr.mxu0 0.0
    %143 = vmatpush2.msra.mxu0 0.0
    %144 = vmatprep.subr.mxu0 0.0
    %145 = vmatpush2.msra.mxu0 0.0
    %146 = vmatprep.subr.mxu0 0.0
    %147 = vmatpush2.msra.mxu0 0.0
    %148 = vmatprep.subr.mxu0 0.0
    %149 = vmatpush2.msra.mxu0 0.0
    %150 = vmatprep.subr.mxu0 0.0
    %151 = vmatpush2.msra.mxu0 0.0
    %152 = vmatprep.subr.mxu0 0.0
    %153 = vmatpush2.msra.mxu0 0.0
    %154 = vmatprep.mubr.f32.mxu0 0.0
    %155 = vmatmul.mubr.f32.gmra.mxu0 %v63
    %v156 = vpop.f32.mrf.mxu0
    %v157 = vadd.f32 %v59, %v156
    %v158 = vpop.f32.mrf.mxu0
    %159 = vmatprep.mubr.f32.mxu0 0.0
    %160 = vmatmul.mubr.f32.gmra.mxu0 %v66
    %v161 = vpop.f32.mrf.mxu0
    %v162 = vadd.f32 %v59, %v161
    %v163 = vpop.f32.mrf.mxu0
    %164 = vmatprep.mubr.f32.mxu0 0.0
    %165 = vmatmul.mubr.f32.gmra.mxu0 %v69
    %v166 = vpop.f32.mrf.mxu0
    %v167 = vadd.f32 %v59, %v166
    %v168 = vpop.f32.mrf.mxu0
    %169 = vmatprep.mubr.f32.mxu0 0.0
    %170 = vmatmul.mubr.f32.gmra.mxu0 %v72
    %v171 = vpop.f32.mrf.mxu0
    %v172 = vadd.f32 %v59, %v171
    %v173 = vpop.f32.mrf.mxu0
    %174 = vmatprep.mubr.f32.mxu0 0.0
    %175 = vmatmul.mubr.f32.gmra.mxu0 %v75
    %v176 = vpop.f32.mrf.mxu0
    %v177 = vadd.f32 %v59, %v176
    %v178 = vpop.f32.mrf.mxu0
    %179 = vmatprep.mubr.f32.mxu0 0.0
    %180 = vmatmul.mubr.f32.gmra.mxu0 %v78
    %v181 = vpop.f32.mrf.mxu0
    %v182 = vadd.f32 %v59, %v181
    %v183 = vpop.f32.mrf.mxu0
    %184 = vmatprep.mubr.f32.mxu0 0.0
    %185 = vmatmul.mubr.f32.gmra.mxu0 %v81
    %v186 = vpop.f32.mrf.mxu0
    %v187 = vadd.f32 %v59, %v186
    %v188 = vpop.f32.mrf.mxu0
    %189 = vmatprep.mubr.f32.mxu0 0.0
    %190 = vmatmul.mubr.f32.gmra.mxu0 %v84
    %v191 = vpop.f32.mrf.mxu0
    %v192 = vadd.f32 %v59, %v191
    %v193 = vpop.f32.mrf.mxu0
    %194 = vdwg.mxu0
    %195 = vst [vmem:[#allocation2] sm:$0xff] %v157
    %196 = vst [vmem:[#allocation2 + $0x8] sm:$0xff] %v162
    %197 = vst [vmem:[#allocation2 + $0x10] sm:$0xff] %v167
    %198 = vst [vmem:[#allocation2 + $0x18] sm:$0xff] %v172
    %199 = vst [vmem:[#allocation2 + $0x20] sm:$0xff] %v177
    %200 = vst [vmem:[#allocation2 + $0x28] sm:$0xff] %v182
    %201 = vst [vmem:[#allocation2 + $0x30] sm:$0xff] %v187
    %202 = vst [vmem:[#allocation2 + $0x38] sm:$0xff] %v192
    %v203 = vld [vmem:[#allocation6] sm:$0xff]
    %v204 = vld [vmem:[#allocation6 + $0x8] sm:$0xff]
    %v205 = vld [vmem:[#allocation6 + $0x10] sm:$0xff]
    %v206 = vld [vmem:[#allocation6 + $0x18] sm:$0xff]
    %v207 = vld [vmem:[%s4] sm:$0xff]
    %v208 = vld [vmem:[%s4 + $0x8] sm:$0xff]
    %v209 = vld [vmem:[%s4 + $0x10] sm:$0xff]
    %v210 = vld [vmem:[%s4 + $0x18] sm:$0xff]
    %v211 = vld [vmem:[%s4 + $0x20] sm:$0xff]
    %v212 = vld [vmem:[%s4 + $0x28] sm:$0xff]
    %v213 = vld [vmem:[%s4 + $0x30] sm:$0xff]
    %v214 = vld [vmem:[%s4 + $0x38] sm:$0xff]
    %v215 = vld [vmem:[%s5] sm:$0x1]
    %vm216 = vcmask 523264
    %217 = vst.msk [vmem:[#allocation3] sm:$0xff] %vm216, 0.0
    %v218 = vlaneseq
    %v219 = vand.u32 %v218, 127
    %vm220 = vcmp.ge.s32.totalorder %v219, 64
    %vm221 = vcmp.lt.s32.totalorder %v219, 96
    %vm222 = vmand %vm220, %vm221
    %v223 = vsel %vm222, 1.0, 0.5
    %v224 = vsel %vm222, 0.0, 0.5
    %v225 = vld [vmem:[#allocation2] sm:$0xff]
    %vm226 = vcmask 261120
    %v228 = vsel %vm226, 0.0, 0
    %230 = vmatprep.subr.mxu0 0.0
    %231 = vmatpush1.msra.mxu0 0.0
    %232 = vmatprep.subr.mxu0 0.0
    %233 = vmatpush1.msra.mxu0 0.0
    %234 = vmatprep.subr.mxu0 0.0
    %235 = vmatpush1.msra.mxu0 0.0
    %236 = vmatprep.subr.mxu0 0.0
    %237 = vmatpush1.msra.mxu0 0.0
    %238 = vmatprep.subr.mxu0 0.0
    %239 = vmatpush1.msra.mxu0 0.0
    %240 = vmatprep.subr.mxu0 0.0
    %241 = vmatpush1.msra.mxu0 0.0
    %242 = vmatprep.subr.mxu0 0.0
    %243 = vmatpush1.msra.mxu0 0.0
    %244 = vmatprep.subr.mxu0 0.0
    %245 = vmatpush1.msra.mxu0 0.0
    %246 = vmatprep.subr.mxu0 0.0
    %247 = vmatpush1.msra.mxu0 0.0
    %248 = vmatprep.subr.mxu0 0.0
    %249 = vmatpush1.msra.mxu0 0.0
    %250 = vmatprep.subr.mxu0 0.0
    %251 = vmatpush1.msra.mxu0 0.0
    %252 = vmatprep.subr.mxu0 0.0
    %253 = vmatpush1.msra.mxu0 0.0
    %254 = vmatprep.subr.mxu0 0.0
    %255 = vmatpush1.msra.mxu0 %v206
    %256 = vmatprep.subr.mxu0 0.0
    %257 = vmatpush1.msra.mxu0 %v205
    %258 = vmatprep.subr.mxu0 0.0
    %259 = vmatpush1.msra.mxu0 %v204
    %260 = vmatprep.subr.mxu0 0.0
    %261 = vmatpush1.msra.mxu0 %v203
    %262 = vmatprep.subr.mxu0 0.0
    %263 = vmatpush2.msra.mxu0 0.0
    %264 = vmatprep.subr.mxu0 0.0
    %265 = vmatpush2.msra.mxu0 0.0
    %266 = vmatprep.subr.mxu0 0.0
    %267 = vmatpush2.msra.mxu0 0.0
    %268 = vmatprep.subr.mxu0 0.0
    %269 = vmatpush2.msra.mxu0 0.0
    %270 = vmatprep.subr.mxu0 0.0
    %271 = vmatpush2.msra.mxu0 0.0
    %272 = vmatprep.subr.mxu0 0.0
    %273 = vmatpush2.msra.mxu0 0.0
    %274 = vmatprep.subr.mxu0 0.0
    %275 = vmatpush2.msra.mxu0 0.0
    %276 = vmatprep.subr.mxu0 0.0
    %277 = vmatpush2.msra.mxu0 0.0
    %278 = vmatprep.subr.mxu0 0.0
    %279 = vmatpush2.msra.mxu0 0.0
    %280 = vmatprep.subr.mxu0 0.0
    %281 = vmatpush2.msra.mxu0 0.0
    %282 = vmatprep.subr.mxu0 0.0
    %283 = vmatpush2.msra.mxu0 0.0
    %284 = vmatprep.subr.mxu0 0.0
    %285 = vmatpush2.msra.mxu0 0.0
    %286 = vmatprep.subr.mxu0 0.0
    %287 = vmatpush2.msra.mxu0 0.0
    %288 = vmatprep.subr.mxu0 0.0
    %289 = vmatpush2.msra.mxu0 0.0
    %290 = vmatprep.subr.mxu0 0.0
    %291 = vmatpush2.msra.mxu0 0.0
    %292 = vmatprep.subr.mxu0 0.0
    %293 = vmatpush2.msra.mxu0 0.0
    %294 = vmatprep.mubr.f32.mxu0 0.0
    %295 = vmatmul.mubr.f32.gmra.mxu0 %v228
    %v296 = vpop.f32.mrf.mxu0
    %v297 = vadd.f32 0.0, %v296
    %v298 = vpop.f32.mrf.mxu0
    %299 = vdwg.mxu0
    %v300 = vadd.f32 %v225, %v297
    %v301 = vmul.f32 %v300, %v223
    %v302 = vtanh.pop %v301
    %v303 = vmul.f32 %v302, %v223
    %v304 = vadd.f32 %v303, %v224
    %v305 = vmul.f32 %v304, 0.0
    %307 = vrot.lane.b32.xlu0 %v304, 64
    %v308 = vpop.permute.xlu0 %307
    %v310 = vmul.f32 %v304, %v308
    %312 = vrot.lane.b32.xlu0 %v310, 32
    %v313 = vpop.permute.xlu0 %312
    %v315 = vadd.f32 %v305, %v313
    %v316 = vtanh.pop %v315
    %318 = vrot.lane.b32.xlu0 %v316, 64
    %v319 = vpop.permute.xlu0 %318
    %v321 = vmul.f32 %v304, %v319
    %323 = vrot.lane.b32.xlu0 %v321, 32
    %v324 = vpop.permute.xlu0 %323
    %326 = vst.msk [vmem:[#allocation3] sm:$0xff] %vm226, %v324
    %v327 = vld [vmem:[#allocation3] sm:$0xff]
    %v329 = vlaneseq
    %v330 = vshrl.u32 %v329, 7
    %v331 = vsub.s32 0, %v330
    %v332 = vrot.slane %v215, %v331
    %v335 = vsel %vm216, %v327, 0
    %337 = vmatprep.subr.mxu0 0.0
    %338 = vmatpush1.msra.mxu0 0.0
    %339 = vmatprep.subr.mxu0 0.0
    %340 = vmatpush1.msra.mxu0 0.0
    %341 = vmatprep.subr.mxu0 0.0
    %342 = vmatpush1.msra.mxu0 0.0
    %343 = vmatprep.subr.mxu0 0.0
    %344 = vmatpush1.msra.mxu0 0.0
    %345 = vmatprep.subr.mxu0 0.0
    %346 = vmatpush1.msra.mxu0 0.0
    %347 = vmatprep.subr.mxu0 0.0
    %348 = vmatpush1.msra.mxu0 0.0
    %349 = vmatprep.subr.mxu0 0.0
    %350 = vmatpush1.msra.mxu0 0.0
    %351 = vmatprep.subr.mxu0 0.0
    %352 = vmatpush1.msra.mxu0 0.0
    %353 = vmatprep.subr.mxu0 0.0
    %354 = vmatpush1.msra.mxu0 %v214
    %355 = vmatprep.subr.mxu0 0.0
    %356 = vmatpush1.msra.mxu0 %v213
    %357 = vmatprep.subr.mxu0 0.0
    %358 = vmatpush1.msra.mxu0 %v212
    %359 = vmatprep.subr.mxu0 0.0
    %360 = vmatpush1.msra.mxu0 %v211
    %361 = vmatprep.subr.mxu0 0.0
    %362 = vmatpush1.msra.mxu0 %v210
    %363 = vmatprep.subr.mxu0 0.0
    %364 = vmatpush1.msra.mxu0 %v209
    %365 = vmatprep.subr.mxu0 0.0
    %366 = vmatpush1.msra.mxu0 %v208
    %367 = vmatprep.subr.mxu0 0.0
    %368 = vmatpush1.msra.mxu0 %v207
    %369 = vmatprep.subr.mxu0 0.0
    %370 = vmatpush2.msra.mxu0 0.0
    %371 = vmatprep.subr.mxu0 0.0
    %372 = vmatpush2.msra.mxu0 0.0
    %373 = vmatprep.subr.mxu0 0.0
    %374 = vmatpush2.msra.mxu0 0.0
    %375 = vmatprep.subr.mxu0 0.0
    %376 = vmatpush2.msra.mxu0 0.0
    %377 = vmatprep.subr.mxu0 0.0
    %378 = vmatpush2.msra.mxu0 0.0
    %379 = vmatprep.subr.mxu0 0.0
    %380 = vmatpush2.msra.mxu0 0.0
    %381 = vmatprep.subr.mxu0 0.0
    %382 = vmatpush2.msra.mxu0 0.0
    %383 = vmatprep.subr.mxu0 0.0
    %384 = vmatpush2.msra.mxu0 0.0
    %385 = vmatprep.subr.mxu0 0.0
    %386 = vmatpush2.msra.mxu0 0.0
    %387 = vmatprep.subr.mxu0 0.0
    %388 = vmatpush2.msra.mxu0 0.0
    %389 = vmatprep.subr.mxu0 0.0
    %390 = vmatpush2.msra.mxu0 0.0
    %391 = vmatprep.subr.mxu0 0.0
    %392 = vmatpush2.msra.mxu0 0.0
    %393 = vmatprep.subr.mxu0 0.0
    %394 = vmatpush2.msra.mxu0 0.0
    %395 = vmatprep.subr.mxu0 0.0
    %396 = vmatpush2.msra.mxu0 0.0
    %397 = vmatprep.subr.mxu0 0.0
    %398 = vmatpush2.msra.mxu0 0.0
    %399 = vmatprep.subr.mxu0 0.0
    %400 = vmatpush2.msra.mxu0 0.0
    %401 = vmatprep.mubr.f32.mxu0 0.0
    %402 = vmatmul.mubr.f32.gmra.mxu0 %v335
    %v403 = vpop.f32.mrf.mxu0
    %v404 = vadd.f32 %v332, %v403
    %v405 = vpop.f32.mrf.mxu0
    %406 = vdwg.mxu0
    %v407 = vmul.f32 %v404, %v223
    %v408 = vtanh.pop %v407
    %v409 = vmul.f32 %v408, %v223
    %v410 = vadd.f32 %v409, %v224
    %v411 = vmul.f32 %v410, 0.0
    %413 = vrot.lane.b32.xlu0 %v410, 64
    %v414 = vpop.permute.xlu0 %413
    %v416 = vmul.f32 %v410, %v414
    %418 = vrot.lane.b32.xlu0 %v416, 32
    %v419 = vpop.permute.xlu0 %418
    %v421 = vadd.f32 %v411, %v419
    %v422 = vtanh.pop %v421
    %424 = vrot.lane.b32.xlu0 %v422, 64
    %v425 = vpop.permute.xlu0 %424
    %v427 = vmul.f32 %v410, %v425
    %429 = vrot.lane.b32.xlu0 %v427, 64
    %v430 = vpop.permute.xlu0 %429
    %vm432 = vcmask 523520
    %433 = vst.msk [vmem:[#allocation3] sm:$0xff] %vm432, %v430
    %434 = vrot.lane.b32.xlu0 %v427, 32
    %v435 = vpop.permute.xlu0 %434
    %437 = vst.msk [vmem:[#allocation4] sm:$0xff] %vm226, %v435
    %s438 = scalar_lea.vmem [#allocation2], 8
    %v439 = vld [vmem:[%s438] sm:$0xff]
    %v440 = vsel %vm226, %v324, 0
    %442 = vmatprep.subr.mxu0 0.0
    %443 = vmatpush1.msra.mxu0 0.0
    %444 = vmatprep.subr.mxu0 0.0
    %445 = vmatpush1.msra.mxu0 0.0
    %446 = vmatprep.subr.mxu0 0.0
    %447 = vmatpush1.msra.mxu0 0.0
    %448 = vmatprep.subr.mxu0 0.0
    %449 = vmatpush1.msra.mxu0 0.0
    %450 = vmatprep.subr.mxu0 0.0
    %451 = vmatpush1.msra.mxu0 0.0
    %452 = vmatprep.subr.mxu0 0.0
    %453 = vmatpush1.msra.mxu0 0.0
    %454 = vmatprep.subr.mxu0 0.0
    %455 = vmatpush1.msra.mxu0 0.0
    %456 = vmatprep.subr.mxu0 0.0
    %457 = vmatpush1.msra.mxu0 0.0
    %458 = vmatprep.subr.mxu0 0.0
    %459 = vmatpush1.msra.mxu0 0.0
    %460 = vmatprep.subr.mxu0 0.0
    %461 = vmatpush1.msra.mxu0 0.0
    %462 = vmatprep.subr.mxu0 0.0
    %463 = vmatpush1.msra.mxu0 0.0
    %464 = vmatprep.subr.mxu0 0.0
    %465 = vmatpush1.msra.mxu0 0.0
    %466 = vmatprep.subr.mxu0 0.0
    %467 = vmatpush1.msra.mxu0 %v206
    %468 = vmatprep.subr.mxu0 0.0
    %469 = vmatpush1.msra.mxu0 %v205
    %470 = vmatprep.subr.mxu0 0.0
    %471 = vmatpush1.msra.mxu0 %v204
    %472 = vmatprep.subr.mxu0 0.0
    %473 = vmatpush1.msra.mxu0 %v203
    %474 = vmatprep.subr.mxu0 0.0
    %475 = vmatpush2.msra.mxu0 0.0
    %476 = vmatprep.subr.mxu0 0.0
    %477 = vmatpush2.msra.mxu0 0.0
    %478 = vmatprep.subr.mxu0 0.0
    %479 = vmatpush2.msra.mxu0 0.0
    %480 = vmatprep.subr.mxu0 0.0
    %481 = vmatpush2.msra.mxu0 0.0
    %482 = vmatprep.subr.mxu0 0.0
    %483 = vmatpush2.msra.mxu0 0.0
    %484 = vmatprep.subr.mxu0 0.0
    %485 = vmatpush2.msra.mxu0 0.0
    %486 = vmatprep.subr.mxu0 0.0
    %487 = vmatpush2.msra.mxu0 0.0
    %488 = vmatprep.subr.mxu0 0.0
    %489 = vmatpush2.msra.mxu0 0.0
    %490 = vmatprep.subr.mxu0 0.0
    %491 = vmatpush2.msra.mxu0 0.0
    %492 = vmatprep.subr.mxu0 0.0
    %493 = vmatpush2.msra.mxu0 0.0
    %494 = vmatprep.subr.mxu0 0.0
    %495 = vmatpush2.msra.mxu0 0.0
    %496 = vmatprep.subr.mxu0 0.0
    %497 = vmatpush2.msra.mxu0 0.0
    %498 = vmatprep.subr.mxu0 0.0
    %499 = vmatpush2.msra.mxu0 0.0
    %500 = vmatprep.subr.mxu0 0.0
    %501 = vmatpush2.msra.mxu0 0.0
    %502 = vmatprep.subr.mxu0 0.0
    %503 = vmatpush2.msra.mxu0 0.0
    %504 = vmatprep.subr.mxu0 0.0
    %505 = vmatpush2.msra.mxu0 0.0
    %506 = vmatprep.mubr.f32.mxu0 0.0
    %507 = vmatmul.mubr.f32.gmra.mxu0 %v440
    %v508 = vpop.f32.mrf.mxu0
    %v509 = vadd.f32 0.0, %v508
    %v510 = vpop.f32.mrf.mxu0
    %511 = vdwg.mxu0
    %v512 = vadd.f32 %v439, %v509
    %v513 = vmul.f32 %v512, %v223
    %v514 = vtanh.pop %v513
    %v515 = vmul.f32 %v514, %v223
    %v516 = vadd.f32 %v515, %v224
    %v517 = vmul.f32 %v516, %v315
    %519 = vrot.lane.b32.xlu0 %v516, 64
    %v520 = vpop.permute.xlu0 %519
    %v522 = vmul.f32 %v516, %v520
    %524 = vrot.lane.b32.xlu0 %v522, 32
    %v525 = vpop.permute.xlu0 %524
    %v527 = vadd.f32 %v517, %v525
    %v528 = vtanh.pop %v527
    %530 = vrot.lane.b32.xlu0 %v528, 64
    %v531 = vpop.permute.xlu0 %530
    %v533 = vmul.f32 %v516, %v531
    %535 = vrot.lane.b32.xlu0 %v533, 32
    %v536 = vpop.permute.xlu0 %535
    %538 = vst.msk [vmem:[#allocation3] sm:$0xff] %vm226, %v536
    %v539 = vld [vmem:[#allocation3] sm:$0xff]
    %v541 = vsel %vm216, %v539, 0
    %543 = vmatprep.subr.mxu0 0.0
    %544 = vmatpush1.msra.mxu0 0.0
    %545 = vmatprep.subr.mxu0 0.0
    %546 = vmatpush1.msra.mxu0 0.0
    %547 = vmatprep.subr.mxu0 0.0
    %548 = vmatpush1.msra.mxu0 0.0
    %549 = vmatprep.subr.mxu0 0.0
    %550 = vmatpush1.msra.mxu0 0.0
    %551 = vmatprep.subr.mxu0 0.0
    %552 = vmatpush1.msra.mxu0 0.0
    %553 = vmatprep.subr.mxu0 0.0
    %554 = vmatpush1.msra.mxu0 0.0
    %555 = vmatprep.subr.mxu0 0.0
    %556 = vmatpush1.msra.mxu0 0.0
    %557 = vmatprep.subr.mxu0 0.0
    %558 = vmatpush1.msra.mxu0 0.0
    %559 = vmatprep.subr.mxu0 0.0
    %560 = vmatpush1.msra.mxu0 %v214
    %561 = vmatprep.subr.mxu0 0.0
    %562 = vmatpush1.msra.mxu0 %v213
    %563 = vmatprep.subr.mxu0 0.0
    %564 = vmatpush1.msra.mxu0 %v212
    %565 = vmatprep.subr.mxu0 0.0
    %566 = vmatpush1.msra.mxu0 %v211
    %567 = vmatprep.subr.mxu0 0.0
    %568 = vmatpush1.msra.mxu0 %v210
    %569 = vmatprep.subr.mxu0 0.0
    %570 = vmatpush1.msra.mxu0 %v209
    %571 = vmatprep.subr.mxu0 0.0
    %572 = vmatpush1.msra.mxu0 %v208
    %573 = vmatprep.subr.mxu0 0.0
    %574 = vmatpush1.msra.mxu0 %v207
    %575 = vmatprep.subr.mxu0 0.0
    %576 = vmatpush2.msra.mxu0 0.0
    %577 = vmatprep.subr.mxu0 0.0
    %578 = vmatpush2.msra.mxu0 0.0
    %579 = vmatprep.subr.mxu0 0.0
    %580 = vmatpush2.msra.mxu0 0.0
    %581 = vmatprep.subr.mxu0 0.0
    %582 = vmatpush2.msra.mxu0 0.0
    %583 = vmatprep.subr.mxu0 0.0
    %584 = vmatpush2.msra.mxu0 0.0
    %585 = vmatprep.subr.mxu0 0.0
    %586 = vmatpush2.msra.mxu0 0.0
    %587 = vmatprep.subr.mxu0 0.0
    %588 = vmatpush2.msra.mxu0 0.0
    %589 = vmatprep.subr.mxu0 0.0
    %590 = vmatpush2.msra.mxu0 0.0
    %591 = vmatprep.subr.mxu0 0.0
    %592 = vmatpush2.msra.mxu0 0.0
    %593 = vmatprep.subr.mxu0 0.0
    %594 = vmatpush2.msra.mxu0 0.0
    %595 = vmatprep.subr.mxu0 0.0
    %596 = vmatpush2.msra.mxu0 0.0
    %597 = vmatprep.subr.mxu0 0.0
    %598 = vmatpush2.msra.mxu0 0.0
    %599 = vmatprep.subr.mxu0 0.0
    %600 = vmatpush2.msra.mxu0 0.0
    %601 = vmatprep.subr.mxu0 0.0
    %602 = vmatpush2.msra.mxu0 0.0
    %603 = vmatprep.subr.mxu0 0.0
    %604 = vmatpush2.msra.mxu0 0.0
    %605 = vmatprep.subr.mxu0 0.0
    %606 = vmatpush2.msra.mxu0 0.0
    %607 = vmatprep.mubr.f32.mxu0 0.0
    %608 = vmatmul.mubr.f32.gmra.mxu0 %v541
    %v609 = vpop.f32.mrf.mxu0
    %v610 = vadd.f32 %v332, %v609
    %v611 = vpop.f32.mrf.mxu0
    %612 = vdwg.mxu0
    %v613 = vmul.f32 %v610, %v223
    %v614 = vtanh.pop %v613
    %v615 = vmul.f32 %v614, %v223
    %v616 = vadd.f32 %v615, %v224
    %v617 = vmul.f32 %v616, %v421
    %619 = vrot.lane.b32.xlu0 %v616, 64
    %v620 = vpop.permute.xlu0 %619
    %v622 = vmul.f32 %v616, %v620
    %624 = vrot.lane.b32.xlu0 %v622, 32
    %v625 = vpop.permute.xlu0 %624
    %v627 = vadd.f32 %v617, %v625
    %v628 = vtanh.pop %v627
    %630 = vrot.lane.b32.xlu0 %v628, 64
    %v631 = vpop.permute.xlu0 %630
    %v633 = vmul.f32 %v616, %v631
    %635 = vrot.lane.b32.xlu0 %v633, 64
    %v636 = vpop.permute.xlu0 %635
    %638 = vst.msk [vmem:[#allocation3] sm:$0xff] %vm432, %v636
    %639 = vrot.lane.b32.xlu0 %v633, 32
    %v640 = vpop.permute.xlu0 %639
    %s642 = scalar_lea.vmem [#allocation4], 8
    %643 = vst.msk [vmem:[%s642] sm:$0xff] %vm226, %v640
    %s644 = scalar_lea.vmem [#allocation2], 16
    %v645 = vld [vmem:[%s644] sm:$0xff]
    %v646 = vsel %vm226, %v536, 0
    %648 = vmatprep.subr.mxu0 0.0
    %649 = vmatpush1.msra.mxu0 0.0
    %650 = vmatprep.subr.mxu0 0.0
    %651 = vmatpush1.msra.mxu0 0.0
    %652 = vmatprep.subr.mxu0 0.0
    %653 = vmatpush1.msra.mxu0 0.0
    %654 = vmatprep.subr.mxu0 0.0
    %655 = vmatpush1.msra.mxu0 0.0
    %656 = vmatprep.subr.mxu0 0.0
    %657 = vmatpush1.msra.mxu0 0.0
    %658 = vmatprep.subr.mxu0 0.0
    %659 = vmatpush1.msra.mxu0 0.0
    %660 = vmatprep.subr.mxu0 0.0
    %661 = vmatpush1.msra.mxu0 0.0
    %662 = vmatprep.subr.mxu0 0.0
    %663 = vmatpush1.msra.mxu0 0.0
    %664 = vmatprep.subr.mxu0 0.0
    %665 = vmatpush1.msra.mxu0 0.0
    %666 = vmatprep.subr.mxu0 0.0
    %667 = vmatpush1.msra.mxu0 0.0
    %668 = vmatprep.subr.mxu0 0.0
    %669 = vmatpush1.msra.mxu0 0.0
    %670 = vmatprep.subr.mxu0 0.0
    %671 = vmatpush1.msra.mxu0 0.0
    %672 = vmatprep.subr.mxu0 0.0
    %673 = vmatpush1.msra.mxu0 %v206
    %674 = vmatprep.subr.mxu0 0.0
    %675 = vmatpush1.msra.mxu0 %v205
    %676 = vmatprep.subr.mxu0 0.0
    %677 = vmatpush1.msra.mxu0 %v204
    %678 = vmatprep.subr.mxu0 0.0
    %679 = vmatpush1.msra.mxu0 %v203
    %680 = vmatprep.subr.mxu0 0.0
    %681 = vmatpush2.msra.mxu0 0.0
    %682 = vmatprep.subr.mxu0 0.0
    %683 = vmatpush2.msra.mxu0 0.0
    %684 = vmatprep.subr.mxu0 0.0
    %685 = vmatpush2.msra.mxu0 0.0
    %686 = vmatprep.subr.mxu0 0.0
    %687 = vmatpush2.msra.mxu0 0.0
    %688 = vmatprep.subr.mxu0 0.0
    %689 = vmatpush2.msra.mxu0 0.0
    %690 = vmatprep.subr.mxu0 0.0
    %691 = vmatpush2.msra.mxu0 0.0
    %692 = vmatprep.subr.mxu0 0.0
    %693 = vmatpush2.msra.mxu0 0.0
    %694 = vmatprep.subr.mxu0 0.0
    %695 = vmatpush2.msra.mxu0 0.0
    %696 = vmatprep.subr.mxu0 0.0
    %697 = vmatpush2.msra.mxu0 0.0
    %698 = vmatprep.subr.mxu0 0.0
    %699 = vmatpush2.msra.mxu0 0.0
    %700 = vmatprep.subr.mxu0 0.0
    %701 = vmatpush2.msra.mxu0 0.0
    %702 = vmatprep.subr.mxu0 0.0
    %703 = vmatpush2.msra.mxu0 0.0
    %704 = vmatprep.subr.mxu0 0.0
    %705 = vmatpush2.msra.mxu0 0.0
    %706 = vmatprep.subr.mxu0 0.0
    %707 = vmatpush2.msra.mxu0 0.0
    %708 = vmatprep.subr.mxu0 0.0
    %709 = vmatpush2.msra.mxu0 0.0
    %710 = vmatprep.subr.mxu0 0.0
    %711 = vmatpush2.msra.mxu0 0.0
    %712 = vmatprep.mubr.f32.mxu0 0.0
    %713 = vmatmul.mubr.f32.gmra.mxu0 %v646
    %v714 = vpop.f32.mrf.mxu0
    %v715 = vadd.f32 0.0, %v714
    %v716 = vpop.f32.mrf.mxu0
    %717 = vdwg.mxu0
    %v718 = vadd.f32 %v645, %v715
    %v719 = vmul.f32 %v718, %v223
    %v720 = vtanh.pop %v719
    %v721 = vmul.f32 %v720, %v223
    %v722 = vadd.f32 %v721, %v224
    %v723 = vmul.f32 %v722, %v527
    %725 = vrot.lane.b32.xlu0 %v722, 64
    %v726 = vpop.permute.xlu0 %725
    %v728 = vmul.f32 %v722, %v726
    %730 = vrot.lane.b32.xlu0 %v728, 32
    %v731 = vpop.permute.xlu0 %730
    %v733 = vadd.f32 %v723, %v731
    %v734 = vtanh.pop %v733
    %736 = vrot.lane.b32.xlu0 %v734, 64
    %v737 = vpop.permute.xlu0 %736
    %v739 = vmul.f32 %v722, %v737
    %741 = vrot.lane.b32.xlu0 %v739, 32
    %v742 = vpop.permute.xlu0 %741
    %744 = vst.msk [vmem:[#allocation3] sm:$0xff] %vm226, %v742
    %v745 = vld [vmem:[#allocation3] sm:$0xff]
    %v747 = vsel %vm216, %v745, 0
    %749 = vmatprep.subr.mxu0 0.0
    %750 = vmatpush1.msra.mxu0 0.0
    %751 = vmatprep.subr.mxu0 0.0
    %752 = vmatpush1.msra.mxu0 0.0
    %753 = vmatprep.subr.mxu0 0.0
    %754 = vmatpush1.msra.mxu0 0.0
    %755 = vmatprep.subr.mxu0 0.0
    %756 = vmatpush1.msra.mxu0 0.0
    %757 = vmatprep.subr.mxu0 0.0
    %758 = vmatpush1.msra.mxu0 0.0
    %759 = vmatprep.subr.mxu0 0.0
    %760 = vmatpush1.msra.mxu0 0.0
    %761 = vmatprep.subr.mxu0 0.0
    %762 = vmatpush1.msra.mxu0 0.0
    %763 = vmatprep.subr.mxu0 0.0
    %764 = vmatpush1.msra.mxu0 0.0
    %765 = vmatprep.subr.mxu0 0.0
    %766 = vmatpush1.msra.mxu0 %v214
    %767 = vmatprep.subr.mxu0 0.0
    %768 = vmatpush1.msra.mxu0 %v213
    %769 = vmatprep.subr.mxu0 0.0
    %770 = vmatpush1.msra.mxu0 %v212
    %771 = vmatprep.subr.mxu0 0.0
    %772 = vmatpush1.msra.mxu0 %v211
    %773 = vmatprep.subr.mxu0 0.0
    %774 = vmatpush1.msra.mxu0 %v210
    %775 = vmatprep.subr.mxu0 0.0
    %776 = vmatpush1.msra.mxu0 %v209
    %777 = vmatprep.subr.mxu0 0.0
    %778 = vmatpush1.msra.mxu0 %v208
    %779 = vmatprep.subr.mxu0 0.0
    %780 = vmatpush1.msra.mxu0 %v207
    %781 = vmatprep.subr.mxu0 0.0
    %782 = vmatpush2.msra.mxu0 0.0
    %783 = vmatprep.subr.mxu0 0.0
    %784 = vmatpush2.msra.mxu0 0.0
    %785 = vmatprep.subr.mxu0 0.0
    %786 = vmatpush2.msra.mxu0 0.0
    %787 = vmatprep.subr.mxu0 0.0
    %788 = vmatpush2.msra.mxu0 0.0
    %789 = vmatprep.subr.mxu0 0.0
    %790 = vmatpush2.msra.mxu0 0.0
    %791 = vmatprep.subr.mxu0 0.0
    %792 = vmatpush2.msra.mxu0 0.0
    %793 = vmatprep.subr.mxu0 0.0
    %794 = vmatpush2.msra.mxu0 0.0
    %795 = vmatprep.subr.mxu0 0.0
    %796 = vmatpush2.msra.mxu0 0.0
    %797 = vmatprep.subr.mxu0 0.0
    %798 = vmatpush2.msra.mxu0 0.0
    %799 = vmatprep.subr.mxu0 0.0
    %800 = vmatpush2.msra.mxu0 0.0
    %801 = vmatprep.subr.mxu0 0.0
    %802 = vmatpush2.msra.mxu0 0.0
    %803 = vmatprep.subr.mxu0 0.0
    %804 = vmatpush2.msra.mxu0 0.0
    %805 = vmatprep.subr.mxu0 0.0
    %806 = vmatpush2.msra.mxu0 0.0
    %807 = vmatprep.subr.mxu0 0.0
    %808 = vmatpush2.msra.mxu0 0.0
    %809 = vmatprep.subr.mxu0 0.0
    %810 = vmatpush2.msra.mxu0 0.0
    %811 = vmatprep.subr.mxu0 0.0
    %812 = vmatpush2.msra.mxu0 0.0
    %813 = vmatprep.mubr.f32.mxu0 0.0
    %814 = vmatmul.mubr.f32.gmra.mxu0 %v747
    %v815 = vpop.f32.mrf.mxu0
    %v816 = vadd.f32 %v332, %v815
    %v817 = vpop.f32.mrf.mxu0
    %818 = vdwg.mxu0
    %v819 = vmul.f32 %v816, %v223
    %v820 = vtanh.pop %v819
    %v821 = vmul.f32 %v820, %v223
    %v822 = vadd.f32 %v821, %v224
    %v823 = vmul.f32 %v822, %v627
    %825 = vrot.lane.b32.xlu0 %v822, 64
    %v826 = vpop.permute.xlu0 %825
    %v828 = vmul.f32 %v822, %v826
    %830 = vrot.lane.b32.xlu0 %v828, 32
    %v831 = vpop.permute.xlu0 %830
    %v833 = vadd.f32 %v823, %v831
    %v834 = vtanh.pop %v833
    %836 = vrot.lane.b32.xlu0 %v834, 64
    %v837 = vpop.permute.xlu0 %836
    %v839 = vmul.f32 %v822, %v837
    %841 = vrot.lane.b32.xlu0 %v839, 64
    %v842 = vpop.permute.xlu0 %841
    %844 = vst.msk [vmem:[#allocation3] sm:$0xff] %vm432, %v842
    %845 = vrot.lane.b32.xlu0 %v839, 32
    %v846 = vpop.permute.xlu0 %845
    %s848 = scalar_lea.vmem [#allocation4], 16
    %849 = vst.msk [vmem:[%s848] sm:$0xff] %vm226, %v846
    %s850 = scalar_lea.vmem [#allocation2], 24
    %v851 = vld [vmem:[%s850] sm:$0xff]
    %v852 = vsel %vm226, %v742, 0
    %854 = vmatprep.subr.mxu0 0.0
    %855 = vmatpush1.msra.mxu0 0.0
    %856 = vmatprep.subr.mxu0 0.0
    %857 = vmatpush1.msra.mxu0 0.0
    %858 = vmatprep.subr.mxu0 0.0
    %859 = vmatpush1.msra.mxu0 0.0
    %860 = vmatprep.subr.mxu0 0.0
    %861 = vmatpush1.msra.mxu0 0.0
    %862 = vmatprep.subr.mxu0 0.0
    %863 = vmatpush1.msra.mxu0 0.0
    %864 = vmatprep.subr.mxu0 0.0
    %865 = vmatpush1.msra.mxu0 0.0
    %866 = vmatprep.subr.mxu0 0.0
    %867 = vmatpush1.msra.mxu0 0.0
    %868 = vmatprep.subr.mxu0 0.0
    %869 = vmatpush1.msra.mxu0 0.0
    %870 = vmatprep.subr.mxu0 0.0
    %871 = vmatpush1.msra.mxu0 0.0
    %872 = vmatprep.subr.mxu0 0.0
    %873 = vmatpush1.msra.mxu0 0.0
    %874 = vmatprep.subr.mxu0 0.0
    %875 = vmatpush1.msra.mxu0 0.0
    %876 = vmatprep.subr.mxu0 0.0
    %877 = vmatpush1.msra.mxu0 0.0
    %878 = vmatprep.subr.mxu0 0.0
    %879 = vmatpush1.msra.mxu0 %v206
    %880 = vmatprep.subr.mxu0 0.0
    %881 = vmatpush1.msra.mxu0 %v205
    %882 = vmatprep.subr.mxu0 0.0
    %883 = vmatpush1.msra.mxu0 %v204
    %884 = vmatprep.subr.mxu0 0.0
    %885 = vmatpush1.msra.mxu0 %v203
    %886 = vmatprep.subr.mxu0 0.0
    %887 = vmatpush2.msra.mxu0 0.0
    %888 = vmatprep.subr.mxu0 0.0
    %889 = vmatpush2.msra.mxu0 0.0
    %890 = vmatprep.subr.mxu0 0.0
    %891 = vmatpush2.msra.mxu0 0.0
    %892 = vmatprep.subr.mxu0 0.0
    %893 = vmatpush2.msra.mxu0 0.0
    %894 = vmatprep.subr.mxu0 0.0
    %895 = vmatpush2.msra.mxu0 0.0
    %896 = vmatprep.subr.mxu0 0.0
    %897 = vmatpush2.msra.mxu0 0.0
    %898 = vmatprep.subr.mxu0 0.0
    %899 = vmatpush2.msra.mxu0 0.0
    %900 = vmatprep.subr.mxu0 0.0
    %901 = vmatpush2.msra.mxu0 0.0
    %902 = vmatprep.subr.mxu0 0.0
    %903 = vmatpush2.msra.mxu0 0.0
    %904 = vmatprep.subr.mxu0 0.0
    %905 = vmatpush2.msra.mxu0 0.0
    %906 = vmatprep.subr.mxu0 0.0
    %907 = vmatpush2.msra.mxu0 0.0
    %908 = vmatprep.subr.mxu0 0.0
    %909 = vmatpush2.msra.mxu0 0.0
    %910 = vmatprep.subr.mxu0 0.0
    %911 = vmatpush2.msra.mxu0 0.0
    %912 = vmatprep.subr.mxu0 0.0
    %913 = vmatpush2.msra.mxu0 0.0
    %914 = vmatprep.subr.mxu0 0.0
    %915 = vmatpush2.msra.mxu0 0.0
    %916 = vmatprep.subr.mxu0 0.0
    %917 = vmatpush2.msra.mxu0 0.0
    %918 = vmatprep.mubr.f32.mxu0 0.0
    %919 = vmatmul.mubr.f32.gmra.mxu0 %v852
    %v920 = vpop.f32.mrf.mxu0
    %v921 = vadd.f32 0.0, %v920
    %v922 = vpop.f32.mrf.mxu0
    %923 = vdwg.mxu0
    %v924 = vadd.f32 %v851, %v921
    %v925 = vmul.f32 %v924, %v223
    %v926 = vtanh.pop %v925
    %v927 = vmul.f32 %v926, %v223
    %v928 = vadd.f32 %v927, %v224
    %v929 = vmul.f32 %v928, %v733
    %931 = vrot.lane.b32.xlu0 %v928, 64
    %v932 = vpop.permute.xlu0 %931
    %v934 = vmul.f32 %v928, %v932
    %936 = vrot.lane.b32.xlu0 %v934, 32
    %v937 = vpop.permute.xlu0 %936
    %v939 = vadd.f32 %v929, %v937
    %v940 = vtanh.pop %v939
    %942 = vrot.lane.b32.xlu0 %v940, 64
    %v943 = vpop.permute.xlu0 %942
    %v945 = vmul.f32 %v928, %v943
    %947 = vrot.lane.b32.xlu0 %v945, 32
    %v948 = vpop.permute.xlu0 %947
    %950 = vst.msk [vmem:[#allocation3] sm:$0xff] %vm226, %v948
    %v951 = vld [vmem:[#allocation3] sm:$0xff]
    %v953 = vsel %vm216, %v951, 0
    %955 = vmatprep.subr.mxu0 0.0
    %956 = vmatpush1.msra.mxu0 0.0
    %957 = vmatprep.subr.mxu0 0.0
    %958 = vmatpush1.msra.mxu0 0.0
    %959 = vmatprep.subr.mxu0 0.0
    %960 = vmatpush1.msra.mxu0 0.0
    %961 = vmatprep.subr.mxu0 0.0
    %962 = vmatpush1.msra.mxu0 0.0
    %963 = vmatprep.subr.mxu0 0.0
    %964 = vmatpush1.msra.mxu0 0.0
    %965 = vmatprep.subr.mxu0 0.0
    %966 = vmatpush1.msra.mxu0 0.0
    %967 = vmatprep.subr.mxu0 0.0
    %968 = vmatpush1.msra.mxu0 0.0
    %969 = vmatprep.subr.mxu0 0.0
    %970 = vmatpush1.msra.mxu0 0.0
    %971 = vmatprep.subr.mxu0 0.0
    %972 = vmatpush1.msra.mxu0 %v214
    %973 = vmatprep.subr.mxu0 0.0
    %974 = vmatpush1.msra.mxu0 %v213
    %975 = vmatprep.subr.mxu0 0.0
    %976 = vmatpush1.msra.mxu0 %v212
    %977 = vmatprep.subr.mxu0 0.0
    %978 = vmatpush1.msra.mxu0 %v211
    %979 = vmatprep.subr.mxu0 0.0
    %980 = vmatpush1.msra.mxu0 %v210
    %981 = vmatprep.subr.mxu0 0.0
    %982 = vmatpush1.msra.mxu0 %v209
    %983 = vmatprep.subr.mxu0 0.0
    %984 = vmatpush1.msra.mxu0 %v208
    %985 = vmatprep.subr.mxu0 0.0
    %986 = vmatpush1.msra.mxu0 %v207
    %987 = vmatprep.subr.mxu0 0.0
    %988 = vmatpush2.msra.mxu0 0.0
    %989 = vmatprep.subr.mxu0 0.0
    %990 = vmatpush2.msra.mxu0 0.0
    %991 = vmatprep.subr.mxu0 0.0
    %992 = vmatpush2.msra.mxu0 0.0
    %993 = vmatprep.subr.mxu0 0.0
    %994 = vmatpush2.msra.mxu0 0.0
    %995 = vmatprep.subr.mxu0 0.0
    %996 = vmatpush2.msra.mxu0 0.0
    %997 = vmatprep.subr.mxu0 0.0
    %998 = vmatpush2.msra.mxu0 0.0
    %999 = vmatprep.subr.mxu0 0.0
    %1000 = vmatpush2.msra.mxu0 0.0
    %1001 = vmatprep.subr.mxu0 0.0
    %1002 = vmatpush2.msra.mxu0 0.0
    %1003 = vmatprep.subr.mxu0 0.0
    %1004 = vmatpush2.msra.mxu0 0.0
    %1005 = vmatprep.subr.mxu0 0.0
    %1006 = vmatpush2.msra.mxu0 0.0
    %1007 = vmatprep.subr.mxu0 0.0
    %1008 = vmatpush2.msra.mxu0 0.0
    %1009 = vmatprep.subr.mxu0 0.0
    %1010 = vmatpush2.msra.mxu0 0.0
    %1011 = vmatprep.subr.mxu0 0.0
    %1012 = vmatpush2.msra.mxu0 0.0
    %1013 = vmatprep.subr.mxu0 0.0
    %1014 = vmatpush2.msra.mxu0 0.0
    %1015 = vmatprep.subr.mxu0 0.0
    %1016 = vmatpush2.msra.mxu0 0.0
    %1017 = vmatprep.subr.mxu0 0.0
    %1018 = vmatpush2.msra.mxu0 0.0
    %1019 = vmatprep.mubr.f32.mxu0 0.0
    %1020 = vmatmul.mubr.f32.gmra.mxu0 %v953
    %v1021 = vpop.f32.mrf.mxu0
    %v1022 = vadd.f32 %v332, %v1021
    %v1023 = vpop.f32.mrf.mxu0
    %1024 = vdwg.mxu0
    %v1025 = vmul.f32 %v1022, %v223
    %v1026 = vtanh.pop %v1025
    %v1027 = vmul.f32 %v1026, %v223
    %v1028 = vadd.f32 %v1027, %v224
    %v1029 = vmul.f32 %v1028, %v833
    %1031 = vrot.lane.b32.xlu0 %v1028, 64
    %v1032 = vpop.permute.xlu0 %1031
    %v1034 = vmul.f32 %v1028, %v1032
    %1036 = vrot.lane.b32.xlu0 %v1034, 32
    %v1037 = vpop.permute.xlu0 %1036
    %v1039 = vadd.f32 %v1029, %v1037
    %v1040 = vtanh.pop %v1039
    %1042 = vrot.lane.b32.xlu0 %v1040, 64
    %v1043 = vpop.permute.xlu0 %1042
    %v1045 = vmul.f32 %v1028, %v1043
    %1047 = vrot.lane.b32.xlu0 %v1045, 64
    %v1048 = vpop.permute.xlu0 %1047
    %1050 = vst.msk [vmem:[#allocation3] sm:$0xff] %vm432, %v1048
    %1051 = vrot.lane.b32.xlu0 %v1045, 32
    %v1052 = vpop.permute.xlu0 %1051
    %s1054 = scalar_lea.vmem [#allocation4], 24
    %1055 = vst.msk [vmem:[%s1054] sm:$0xff] %vm226, %v1052
    %s1056 = scalar_lea.vmem [#allocation2], 32
    %v1057 = vld [vmem:[%s1056] sm:$0xff]
    %v1058 = vsel %vm226, %v948, 0
    %1060 = vmatprep.subr.mxu0 0.0
    %1061 = vmatpush1.msra.mxu0 0.0
    %1062 = vmatprep.subr.mxu0 0.0
    %1063 = vmatpush1.msra.mxu0 0.0
    %1064 = vmatprep.subr.mxu0 0.0
    %1065 = vmatpush1.msra.mxu0 0.0
    %1066 = vmatprep.subr.mxu0 0.0
    %1067 = vmatpush1.msra.mxu0 0.0
    %1068 = vmatprep.subr.mxu0 0.0
    %1069 = vmatpush1.msra.mxu0 0.0
    %1070 = vmatprep.subr.mxu0 0.0
    %1071 = vmatpush1.msra.mxu0 0.0
    %1072 = vmatprep.subr.mxu0 0.0
    %1073 = vmatpush1.msra.mxu0 0.0
    %1074 = vmatprep.subr.mxu0 0.0
    %1075 = vmatpush1.msra.mxu0 0.0
    %1076 = vmatprep.subr.mxu0 0.0
    %1077 = vmatpush1.msra.mxu0 0.0
    %1078 = vmatprep.subr.mxu0 0.0
    %1079 = vmatpush1.msra.mxu0 0.0
    %1080 = vmatprep.subr.mxu0 0.0
    %1081 = vmatpush1.msra.mxu0 0.0
    %1082 = vmatprep.subr.mxu0 0.0
    %1083 = vmatpush1.msra.mxu0 0.0
    %1084 = vmatprep.subr.mxu0 0.0
    %1085 = vmatpush1.msra.mxu0 %v206
    %1086 = vmatprep.subr.mxu0 0.0
    %1087 = vmatpush1.msra.mxu0 %v205
    %1088 = vmatprep.subr.mxu0 0.0
    %1089 = vmatpush1.msra.mxu0 %v204
    %1090 = vmatprep.subr.mxu0 0.0
    %1091 = vmatpush1.msra.mxu0 %v203
    %1092 = vmatprep.subr.mxu0 0.0
    %1093 = vmatpush2.msra.mxu0 0.0
    %1094 = vmatprep.subr.mxu0 0.0
    %1095 = vmatpush2.msra.mxu0 0.0
    %1096 = vmatprep.subr.mxu0 0.0
    %1097 = vmatpush2.msra.mxu0 0.0
    %1098 = vmatprep.subr.mxu0 0.0
    %1099 = vmatpush2.msra.mxu0 0.0
    %1100 = vmatprep.subr.mxu0 0.0
    %1101 = vmatpush2.msra.mxu0 0.0
    %1102 = vmatprep.subr.mxu0 0.0
    %1103 = vmatpush2.msra.mxu0 0.0
    %1104 = vmatprep.subr.mxu0 0.0
    %1105 = vmatpush2.msra.mxu0 0.0
    %1106 = vmatprep.subr.mxu0 0.0
    %1107 = vmatpush2.msra.mxu0 0.0
    %1108 = vmatprep.subr.mxu0 0.0
    %1109 = vmatpush2.msra.mxu0 0.0
    %1110 = vmatprep.subr.mxu0 0.0
    %1111 = vmatpush2.msra.mxu0 0.0
    %1112 = vmatprep.subr.mxu0 0.0
    %1113 = vmatpush2.msra.mxu0 0.0
    %1114 = vmatprep.subr.mxu0 0.0
    %1115 = vmatpush2.msra.mxu0 0.0
    %1116 = vmatprep.subr.mxu0 0.0
    %1117 = vmatpush2.msra.mxu0 0.0
    %1118 = vmatprep.subr.mxu0 0.0
    %1119 = vmatpush2.msra.mxu0 0.0
    %1120 = vmatprep.subr.mxu0 0.0
    %1121 = vmatpush2.msra.mxu0 0.0
    %1122 = vmatprep.subr.mxu0 0.0
    %1123 = vmatpush2.msra.mxu0 0.0
    %1124 = vmatprep.mubr.f32.mxu0 0.0
    %1125 = vmatmul.mubr.f32.gmra.mxu0 %v1058
    %v1126 = vpop.f32.mrf.mxu0
    %v1127 = vadd.f32 0.0, %v1126
    %v1128 = vpop.f32.mrf.mxu0
    %1129 = vdwg.mxu0
    %v1130 = vadd.f32 %v1057, %v1127
    %v1131 = vmul.f32 %v1130, %v223
    %v1132 = vtanh.pop %v1131
    %v1133 = vmul.f32 %v1132, %v223
    %v1134 = vadd.f32 %v1133, %v224
    %v1135 = vmul.f32 %v1134, %v939
    %1137 = vrot.lane.b32.xlu0 %v1134, 64
    %v1138 = vpop.permute.xlu0 %1137
    %v1140 = vmul.f32 %v1134, %v1138
    %1142 = vrot.lane.b32.xlu0 %v1140, 32
    %v1143 = vpop.permute.xlu0 %1142
    %v1145 = vadd.f32 %v1135, %v1143
    %v1146 = vtanh.pop %v1145
    %1148 = vrot.lane.b32.xlu0 %v1146, 64
    %v1149 = vpop.permute.xlu0 %1148
    %v1151 = vmul.f32 %v1134, %v1149
    %1153 = vrot.lane.b32.xlu0 %v1151, 32
    %v1154 = vpop.permute.xlu0 %1153
    %1156 = vst.msk [vmem:[#allocation3] sm:$0xff] %vm226, %v1154
    %v1157 = vld [vmem:[#allocation3] sm:$0xff]
    %v1159 = vsel %vm216, %v1157, 0
    %1161 = vmatprep.subr.mxu0 0.0
    %1162 = vmatpush1.msra.mxu0 0.0
    %1163 = vmatprep.subr.mxu0 0.0
    %1164 = vmatpush1.msra.mxu0 0.0
    %1165 = vmatprep.subr.mxu0 0.0
    %1166 = vmatpush1.msra.mxu0 0.0
    %1167 = vmatprep.subr.mxu0 0.0
    %1168 = vmatpush1.msra.mxu0 0.0
    %1169 = vmatprep.subr.mxu0 0.0
    %1170 = vmatpush1.msra.mxu0 0.0
    %1171 = vmatprep.subr.mxu0 0.0
    %1172 = vmatpush1.msra.mxu0 0.0
    %1173 = vmatprep.subr.mxu0 0.0
    %1174 = vmatpush1.msra.mxu0 0.0
    %1175 = vmatprep.subr.mxu0 0.0
    %1176 = vmatpush1.msra.mxu0 0.0
    %1177 = vmatprep.subr.mxu0 0.0
    %1178 = vmatpush1.msra.mxu0 %v214
    %1179 = vmatprep.subr.mxu0 0.0
    %1180 = vmatpush1.msra.mxu0 %v213
    %1181 = vmatprep.subr.mxu0 0.0
    %1182 = vmatpush1.msra.mxu0 %v212
    %1183 = vmatprep.subr.mxu0 0.0
    %1184 = vmatpush1.msra.mxu0 %v211
    %1185 = vmatprep.subr.mxu0 0.0
    %1186 = vmatpush1.msra.mxu0 %v210
    %1187 = vmatprep.subr.mxu0 0.0
    %1188 = vmatpush1.msra.mxu0 %v209
    %1189 = vmatprep.subr.mxu0 0.0
    %1190 = vmatpush1.msra.mxu0 %v208
    %1191 = vmatprep.subr.mxu0 0.0
    %1192 = vmatpush1.msra.mxu0 %v207
    %1193 = vmatprep.subr.mxu0 0.0
    %1194 = vmatpush2.msra.mxu0 0.0
    %1195 = vmatprep.subr.mxu0 0.0
    %1196 = vmatpush2.msra.mxu0 0.0
    %1197 = vmatprep.subr.mxu0 0.0
    %1198 = vmatpush2.msra.mxu0 0.0
    %1199 = vmatprep.subr.mxu0 0.0
    %1200 = vmatpush2.msra.mxu0 0.0
    %1201 = vmatprep.subr.mxu0 0.0
    %1202 = vmatpush2.msra.mxu0 0.0
    %1203 = vmatprep.subr.mxu0 0.0
    %1204 = vmatpush2.msra.mxu0 0.0
    %1205 = vmatprep.subr.mxu0 0.0
    %1206 = vmatpush2.msra.mxu0 0.0
    %1207 = vmatprep.subr.mxu0 0.0
    %1208 = vmatpush2.msra.mxu0 0.0
    %1209 = vmatprep.subr.mxu0 0.0
    %1210 = vmatpush2.msra.mxu0 0.0
    %1211 = vmatprep.subr.mxu0 0.0
    %1212 = vmatpush2.msra.mxu0 0.0
    %1213 = vmatprep.subr.mxu0 0.0
    %1214 = vmatpush2.msra.mxu0 0.0
    %1215 = vmatprep.subr.mxu0 0.0
    %1216 = vmatpush2.msra.mxu0 0.0
    %1217 = vmatprep.subr.mxu0 0.0
    %1218 = vmatpush2.msra.mxu0 0.0
    %1219 = vmatprep.subr.mxu0 0.0
    %1220 = vmatpush2.msra.mxu0 0.0
    %1221 = vmatprep.subr.mxu0 0.0
    %1222 = vmatpush2.msra.mxu0 0.0
    %1223 = vmatprep.subr.mxu0 0.0
    %1224 = vmatpush2.msra.mxu0 0.0
    %1225 = vmatprep.mubr.f32.mxu0 0.0
    %1226 = vmatmul.mubr.f32.gmra.mxu0 %v1159
    %v1227 = vpop.f32.mrf.mxu0
    %v1228 = vadd.f32 %v332, %v1227
    %v1229 = vpop.f32.mrf.mxu0
    %1230 = vdwg.mxu0
    %v1231 = vmul.f32 %v1228, %v223
    %v1232 = vtanh.pop %v1231
    %v1233 = vmul.f32 %v1232, %v223
    %v1234 = vadd.f32 %v1233, %v224
    %v1235 = vmul.f32 %v1234, %v1039
    %1237 = vrot.lane.b32.xlu0 %v1234, 64
    %v1238 = vpop.permute.xlu0 %1237
    %v1240 = vmul.f32 %v1234, %v1238
    %1242 = vrot.lane.b32.xlu0 %v1240, 32
    %v1243 = vpop.permute.xlu0 %1242
    %v1245 = vadd.f32 %v1235, %v1243
    %v1246 = vtanh.pop %v1245
    %1248 = vrot.lane.b32.xlu0 %v1246, 64
    %v1249 = vpop.permute.xlu0 %1248
    %v1251 = vmul.f32 %v1234, %v1249
    %1253 = vrot.lane.b32.xlu0 %v1251, 64
    %v1254 = vpop.permute.xlu0 %1253
    %1256 = vst.msk [vmem:[#allocation3] sm:$0xff] %vm432, %v1254
    %1257 = vrot.lane.b32.xlu0 %v1251, 32
    %v1258 = vpop.permute.xlu0 %1257
    %s1260 = scalar_lea.vmem [#allocation4], 32
    %1261 = vst.msk [vmem:[%s1260] sm:$0xff] %vm226, %v1258
    %s1262 = scalar_lea.vmem [#allocation2], 40
    %v1263 = vld [vmem:[%s1262] sm:$0xff]
    %v1264 = vsel %vm226, %v1154, 0
    %1266 = vmatprep.subr.mxu0 0.0
    %1267 = vmatpush1.msra.mxu0 0.0
    %1268 = vmatprep.subr.mxu0 0.0
    %1269 = vmatpush1.msra.mxu0 0.0
    %1270 = vmatprep.subr.mxu0 0.0
    %1271 = vmatpush1.msra.mxu0 0.0
    %1272 = vmatprep.subr.mxu0 0.0
    %1273 = vmatpush1.msra.mxu0 0.0
    %1274 = vmatprep.subr.mxu0 0.0
    %1275 = vmatpush1.msra.mxu0 0.0
    %1276 = vmatprep.subr.mxu0 0.0
    %1277 = vmatpush1.msra.mxu0 0.0
    %1278 = vmatprep.subr.mxu0 0.0
    %1279 = vmatpush1.msra.mxu0 0.0
    %1280 = vmatprep.subr.mxu0 0.0
    %1281 = vmatpush1.msra.mxu0 0.0
    %1282 = vmatprep.subr.mxu0 0.0
    %1283 = vmatpush1.msra.mxu0 0.0
    %1284 = vmatprep.subr.mxu0 0.0
    %1285 = vmatpush1.msra.mxu0 0.0
    %1286 = vmatprep.subr.mxu0 0.0
    %1287 = vmatpush1.msra.mxu0 0.0
    %1288 = vmatprep.subr.mxu0 0.0
    %1289 = vmatpush1.msra.mxu0 0.0
    %1290 = vmatprep.subr.mxu0 0.0
    %1291 = vmatpush1.msra.mxu0 %v206
    %1292 = vmatprep.subr.mxu0 0.0
    %1293 = vmatpush1.msra.mxu0 %v205
    %1294 = vmatprep.subr.mxu0 0.0
    %1295 = vmatpush1.msra.mxu0 %v204
    %1296 = vmatprep.subr.mxu0 0.0
    %1297 = vmatpush1.msra.mxu0 %v203
    %1298 = vmatprep.subr.mxu0 0.0
    %1299 = vmatpush2.msra.mxu0 0.0
    %1300 = vmatprep.subr.mxu0 0.0
    %1301 = vmatpush2.msra.mxu0 0.0
    %1302 = vmatprep.subr.mxu0 0.0
    %1303 = vmatpush2.msra.mxu0 0.0
    %1304 = vmatprep.subr.mxu0 0.0
    %1305 = vmatpush2.msra.mxu0 0.0
    %1306 = vmatprep.subr.mxu0 0.0
    %1307 = vmatpush2.msra.mxu0 0.0
    %1308 = vmatprep.subr.mxu0 0.0
    %1309 = vmatpush2.msra.mxu0 0.0
    %1310 = vmatprep.subr.mxu0 0.0
    %1311 = vmatpush2.msra.mxu0 0.0
    %1312 = vmatprep.subr.mxu0 0.0
    %1313 = vmatpush2.msra.mxu0 0.0
    %1314 = vmatprep.subr.mxu0 0.0
    %1315 = vmatpush2.msra.mxu0 0.0
    %1316 = vmatprep.subr.mxu0 0.0
    %1317 = vmatpush2.msra.mxu0 0.0
    %1318 = vmatprep.subr.mxu0 0.0
    %1319 = vmatpush2.msra.mxu0 0.0
    %1320 = vmatprep.subr.mxu0 0.0
    %1321 = vmatpush2.msra.mxu0 0.0
    %1322 = vmatprep.subr.mxu0 0.0
    %1323 = vmatpush2.msra.mxu0 0.0
    %1324 = vmatprep.subr.mxu0 0.0
    %1325 = vmatpush2.msra.mxu0 0.0
    %1326 = vmatprep.subr.mxu0 0.0
    %1327 = vmatpush2.msra.mxu0 0.0
    %1328 = vmatprep.subr.mxu0 0.0
    %1329 = vmatpush2.msra.mxu0 0.0
    %1330 = vmatprep.mubr.f32.mxu0 0.0
    %1331 = vmatmul.mubr.f32.gmra.mxu0 %v1264
    %v1332 = vpop.f32.mrf.mxu0
    %v1333 = vadd.f32 0.0, %v1332
    %v1334 = vpop.f32.mrf.mxu0
    %1335 = vdwg.mxu0
    %v1336 = vadd.f32 %v1263, %v1333
    %v1337 = vmul.f32 %v1336, %v223
    %v1338 = vtanh.pop %v1337
    %v1339 = vmul.f32 %v1338, %v223
    %v1340 = vadd.f32 %v1339, %v224
    %v1341 = vmul.f32 %v1340, %v1145
    %1343 = vrot.lane.b32.xlu0 %v1340, 64
    %v1344 = vpop.permute.xlu0 %1343
    %v1346 = vmul.f32 %v1340, %v1344
    %1348 = vrot.lane.b32.xlu0 %v1346, 32
    %v1349 = vpop.permute.xlu0 %1348
    %v1351 = vadd.f32 %v1341, %v1349
    %v1352 = vtanh.pop %v1351
    %1354 = vrot.lane.b32.xlu0 %v1352, 64
    %v1355 = vpop.permute.xlu0 %1354
    %v1357 = vmul.f32 %v1340, %v1355
    %1359 = vrot.lane.b32.xlu0 %v1357, 32
    %v1360 = vpop.permute.xlu0 %1359
    %1362 = vst.msk [vmem:[#allocation3] sm:$0xff] %vm226, %v1360
    %v1363 = vld [vmem:[#allocation3] sm:$0xff]
    %v1365 = vsel %vm216, %v1363, 0
    %1367 = vmatprep.subr.mxu0 0.0
    %1368 = vmatpush1.msra.mxu0 0.0
    %1369 = vmatprep.subr.mxu0 0.0
    %1370 = vmatpush1.msra.mxu0 0.0
    %1371 = vmatprep.subr.mxu0 0.0
    %1372 = vmatpush1.msra.mxu0 0.0
    %1373 = vmatprep.subr.mxu0 0.0
    %1374 = vmatpush1.msra.mxu0 0.0
    %1375 = vmatprep.subr.mxu0 0.0
    %1376 = vmatpush1.msra.mxu0 0.0
    %1377 = vmatprep.subr.mxu0 0.0
    %1378 = vmatpush1.msra.mxu0 0.0
    %1379 = vmatprep.subr.mxu0 0.0
    %1380 = vmatpush1.msra.mxu0 0.0
    %1381 = vmatprep.subr.mxu0 0.0
    %1382 = vmatpush1.msra.mxu0 0.0
    %1383 = vmatprep.subr.mxu0 0.0
    %1384 = vmatpush1.msra.mxu0 %v214
    %1385 = vmatprep.subr.mxu0 0.0
    %1386 = vmatpush1.msra.mxu0 %v213
    %1387 = vmatprep.subr.mxu0 0.0
    %1388 = vmatpush1.msra.mxu0 %v212
    %1389 = vmatprep.subr.mxu0 0.0
    %1390 = vmatpush1.msra.mxu0 %v211
    %1391 = vmatprep.subr.mxu0 0.0
    %1392 = vmatpush1.msra.mxu0 %v210
    %1393 = vmatprep.subr.mxu0 0.0
    %1394 = vmatpush1.msra.mxu0 %v209
    %1395 = vmatprep.subr.mxu0 0.0
    %1396 = vmatpush1.msra.mxu0 %v208
    %1397 = vmatprep.subr.mxu0 0.0
    %1398 = vmatpush1.msra.mxu0 %v207
    %1399 = vmatprep.subr.mxu0 0.0
    %1400 = vmatpush2.msra.mxu0 0.0
    %1401 = vmatprep.subr.mxu0 0.0
    %1402 = vmatpush2.msra.mxu0 0.0
    %1403 = vmatprep.subr.mxu0 0.0
    %1404 = vmatpush2.msra.mxu0 0.0
    %1405 = vmatprep.subr.mxu0 0.0
    %1406 = vmatpush2.msra.mxu0 0.0
    %1407 = vmatprep.subr.mxu0 0.0
    %1408 = vmatpush2.msra.mxu0 0.0
    %1409 = vmatprep.subr.mxu0 0.0
    %1410 = vmatpush2.msra.mxu0 0.0
    %1411 = vmatprep.subr.mxu0 0.0
    %1412 = vmatpush2.msra.mxu0 0.0
    %1413 = vmatprep.subr.mxu0 0.0
    %1414 = vmatpush2.msra.mxu0 0.0
    %1415 = vmatprep.subr.mxu0 0.0
    %1416 = vmatpush2.msra.mxu0 0.0
    %1417 = vmatprep.subr.mxu0 0.0
    %1418 = vmatpush2.msra.mxu0 0.0
    %1419 = vmatprep.subr.mxu0 0.0
    %1420 = vmatpush2.msra.mxu0 0.0
    %1421 = vmatprep.subr.mxu0 0.0
    %1422 = vmatpush2.msra.mxu0 0.0
    %1423 = vmatprep.subr.mxu0 0.0
    %1424 = vmatpush2.msra.mxu0 0.0
    %1425 = vmatprep.subr.mxu0 0.0
    %1426 = vmatpush2.msra.mxu0 0.0
    %1427 = vmatprep.subr.mxu0 0.0
    %1428 = vmatpush2.msra.mxu0 0.0
    %1429 = vmatprep.subr.mxu0 0.0
    %1430 = vmatpush2.msra.mxu0 0.0
    %1431 = vmatprep.mubr.f32.mxu0 0.0
    %1432 = vmatmul.mubr.f32.gmra.mxu0 %v1365
    %v1433 = vpop.f32.mrf.mxu0
    %v1434 = vadd.f32 %v332, %v1433
    %v1435 = vpop.f32.mrf.mxu0
    %1436 = vdwg.mxu0
    %v1437 = vmul.f32 %v1434, %v223
    %v1438 = vtanh.pop %v1437
    %v1439 = vmul.f32 %v1438, %v223
    %v1440 = vadd.f32 %v1439, %v224
    %v1441 = vmul.f32 %v1440, %v1245
    %1443 = vrot.lane.b32.xlu0 %v1440, 64
    %v1444 = vpop.permute.xlu0 %1443
    %v1446 = vmul.f32 %v1440, %v1444
    %1448 = vrot.lane.b32.xlu0 %v1446, 32
    %v1449 = vpop.permute.xlu0 %1448
    %v1451 = vadd.f32 %v1441, %v1449
    %v1452 = vtanh.pop %v1451
    %1454 = vrot.lane.b32.xlu0 %v1452, 64
    %v1455 = vpop.permute.xlu0 %1454
    %v1457 = vmul.f32 %v1440, %v1455
    %1459 = vrot.lane.b32.xlu0 %v1457, 64
    %v1460 = vpop.permute.xlu0 %1459
    %1462 = vst.msk [vmem:[#allocation3] sm:$0xff] %vm432, %v1460
    %1463 = vrot.lane.b32.xlu0 %v1457, 32
    %v1464 = vpop.permute.xlu0 %1463
    %s1466 = scalar_lea.vmem [#allocation4], 40
    %1467 = vst.msk [vmem:[%s1466] sm:$0xff] %vm226, %v1464
    %s1468 = scalar_lea.vmem [#allocation2], 48
    %v1469 = vld [vmem:[%s1468] sm:$0xff]
    %v1470 = vsel %vm226, %v1360, 0
    %1472 = vmatprep.subr.mxu0 0.0
    %1473 = vmatpush1.msra.mxu0 0.0
    %1474 = vmatprep.subr.mxu0 0.0
    %1475 = vmatpush1.msra.mxu0 0.0
    %1476 = vmatprep.subr.mxu0 0.0
    %1477 = vmatpush1.msra.mxu0 0.0
    %1478 = vmatprep.subr.mxu0 0.0
    %1479 = vmatpush1.msra.mxu0 0.0
    %1480 = vmatprep.subr.mxu0 0.0
    %1481 = vmatpush1.msra.mxu0 0.0
    %1482 = vmatprep.subr.mxu0 0.0
    %1483 = vmatpush1.msra.mxu0 0.0
    %1484 = vmatprep.subr.mxu0 0.0
    %1485 = vmatpush1.msra.mxu0 0.0
    %1486 = vmatprep.subr.mxu0 0.0
    %1487 = vmatpush1.msra.mxu0 0.0
    %1488 = vmatprep.subr.mxu0 0.0
    %1489 = vmatpush1.msra.mxu0 0.0
    %1490 = vmatprep.subr.mxu0 0.0
    %1491 = vmatpush1.msra.mxu0 0.0
    %1492 = vmatprep.subr.mxu0 0.0
    %1493 = vmatpush1.msra.mxu0 0.0
    %1494 = vmatprep.subr.mxu0 0.0
    %1495 = vmatpush1.msra.mxu0 0.0
    %1496 = vmatprep.subr.mxu0 0.0
    %1497 = vmatpush1.msra.mxu0 %v206
    %1498 = vmatprep.subr.mxu0 0.0
    %1499 = vmatpush1.msra.mxu0 %v205
    %1500 = vmatprep.subr.mxu0 0.0
    %1501 = vmatpush1.msra.mxu0 %v204
    %1502 = vmatprep.subr.mxu0 0.0
    %1503 = vmatpush1.msra.mxu0 %v203
    %1504 = vmatprep.subr.mxu0 0.0
    %1505 = vmatpush2.msra.mxu0 0.0
    %1506 = vmatprep.subr.mxu0 0.0
    %1507 = vmatpush2.msra.mxu0 0.0
    %1508 = vmatprep.subr.mxu0 0.0
    %1509 = vmatpush2.msra.mxu0 0.0
    %1510 = vmatprep.subr.mxu0 0.0
    %1511 = vmatpush2.msra.mxu0 0.0
    %1512 = vmatprep.subr.mxu0 0.0
    %1513 = vmatpush2.msra.mxu0 0.0
    %1514 = vmatprep.subr.mxu0 0.0
    %1515 = vmatpush2.msra.mxu0 0.0
    %1516 = vmatprep.subr.mxu0 0.0
    %1517 = vmatpush2.msra.mxu0 0.0
    %1518 = vmatprep.subr.mxu0 0.0
    %1519 = vmatpush2.msra.mxu0 0.0
    %1520 = vmatprep.subr.mxu0 0.0
    %1521 = vmatpush2.msra.mxu0 0.0
    %1522 = vmatprep.subr.mxu0 0.0
    %1523 = vmatpush2.msra.mxu0 0.0
    %1524 = vmatprep.subr.mxu0 0.0
    %1525 = vmatpush2.msra.mxu0 0.0
    %1526 = vmatprep.subr.mxu0 0.0
    %1527 = vmatpush2.msra.mxu0 0.0
    %1528 = vmatprep.subr.mxu0 0.0
    %1529 = vmatpush2.msra.mxu0 0.0
    %1530 = vmatprep.subr.mxu0 0.0
    %1531 = vmatpush2.msra.mxu0 0.0
    %1532 = vmatprep.subr.mxu0 0.0
    %1533 = vmatpush2.msra.mxu0 0.0
    %1534 = vmatprep.subr.mxu0 0.0
    %1535 = vmatpush2.msra.mxu0 0.0
    %1536 = vmatprep.mubr.f32.mxu0 0.0
    %1537 = vmatmul.mubr.f32.gmra.mxu0 %v1470
    %v1538 = vpop.f32.mrf.mxu0
    %v1539 = vadd.f32 0.0, %v1538
    %v1540 = vpop.f32.mrf.mxu0
    %1541 = vdwg.mxu0
    %v1542 = vadd.f32 %v1469, %v1539
    %v1543 = vmul.f32 %v1542, %v223
    %v1544 = vtanh.pop %v1543
    %v1545 = vmul.f32 %v1544, %v223
    %v1546 = vadd.f32 %v1545, %v224
    %v1547 = vmul.f32 %v1546, %v1351
    %1549 = vrot.lane.b32.xlu0 %v1546, 64
    %v1550 = vpop.permute.xlu0 %1549
    %v1552 = vmul.f32 %v1546, %v1550
    %1554 = vrot.lane.b32.xlu0 %v1552, 32
    %v1555 = vpop.permute.xlu0 %1554
    %v1557 = vadd.f32 %v1547, %v1555
    %v1558 = vtanh.pop %v1557
    %1560 = vrot.lane.b32.xlu0 %v1558, 64
    %v1561 = vpop.permute.xlu0 %1560
    %v1563 = vmul.f32 %v1546, %v1561
    %1565 = vrot.lane.b32.xlu0 %v1563, 32
    %v1566 = vpop.permute.xlu0 %1565
    %1568 = vst.msk [vmem:[#allocation3] sm:$0xff] %vm226, %v1566
    %v1569 = vld [vmem:[#allocation3] sm:$0xff]
    %v1571 = vsel %vm216, %v1569, 0
    %1573 = vmatprep.subr.mxu0 0.0
    %1574 = vmatpush1.msra.mxu0 0.0
    %1575 = vmatprep.subr.mxu0 0.0
    %1576 = vmatpush1.msra.mxu0 0.0
    %1577 = vmatprep.subr.mxu0 0.0
    %1578 = vmatpush1.msra.mxu0 0.0
    %1579 = vmatprep.subr.mxu0 0.0
    %1580 = vmatpush1.msra.mxu0 0.0
    %1581 = vmatprep.subr.mxu0 0.0
    %1582 = vmatpush1.msra.mxu0 0.0
    %1583 = vmatprep.subr.mxu0 0.0
    %1584 = vmatpush1.msra.mxu0 0.0
    %1585 = vmatprep.subr.mxu0 0.0
    %1586 = vmatpush1.msra.mxu0 0.0
    %1587 = vmatprep.subr.mxu0 0.0
    %1588 = vmatpush1.msra.mxu0 0.0
    %1589 = vmatprep.subr.mxu0 0.0
    %1590 = vmatpush1.msra.mxu0 %v214
    %1591 = vmatprep.subr.mxu0 0.0
    %1592 = vmatpush1.msra.mxu0 %v213
    %1593 = vmatprep.subr.mxu0 0.0
    %1594 = vmatpush1.msra.mxu0 %v212
    %1595 = vmatprep.subr.mxu0 0.0
    %1596 = vmatpush1.msra.mxu0 %v211
    %1597 = vmatprep.subr.mxu0 0.0
    %1598 = vmatpush1.msra.mxu0 %v210
    %1599 = vmatprep.subr.mxu0 0.0
    %1600 = vmatpush1.msra.mxu0 %v209
    %1601 = vmatprep.subr.mxu0 0.0
    %1602 = vmatpush1.msra.mxu0 %v208
    %1603 = vmatprep.subr.mxu0 0.0
    %1604 = vmatpush1.msra.mxu0 %v207
    %1605 = vmatprep.subr.mxu0 0.0
    %1606 = vmatpush2.msra.mxu0 0.0
    %1607 = vmatprep.subr.mxu0 0.0
    %1608 = vmatpush2.msra.mxu0 0.0
    %1609 = vmatprep.subr.mxu0 0.0
    %1610 = vmatpush2.msra.mxu0 0.0
    %1611 = vmatprep.subr.mxu0 0.0
    %1612 = vmatpush2.msra.mxu0 0.0
    %1613 = vmatprep.subr.mxu0 0.0
    %1614 = vmatpush2.msra.mxu0 0.0
    %1615 = vmatprep.subr.mxu0 0.0
    %1616 = vmatpush2.msra.mxu0 0.0
    %1617 = vmatprep.subr.mxu0 0.0
    %1618 = vmatpush2.msra.mxu0 0.0
    %1619 = vmatprep.subr.mxu0 0.0
    %1620 = vmatpush2.msra.mxu0 0.0
    %1621 = vmatprep.subr.mxu0 0.0
    %1622 = vmatpush2.msra.mxu0 0.0
    %1623 = vmatprep.subr.mxu0 0.0
    %1624 = vmatpush2.msra.mxu0 0.0
    %1625 = vmatprep.subr.mxu0 0.0
    %1626 = vmatpush2.msra.mxu0 0.0
    %1627 = vmatprep.subr.mxu0 0.0
    %1628 = vmatpush2.msra.mxu0 0.0
    %1629 = vmatprep.subr.mxu0 0.0
    %1630 = vmatpush2.msra.mxu0 0.0
    %1631 = vmatprep.subr.mxu0 0.0
    %1632 = vmatpush2.msra.mxu0 0.0
    %1633 = vmatprep.subr.mxu0 0.0
    %1634 = vmatpush2.msra.mxu0 0.0
    %1635 = vmatprep.subr.mxu0 0.0
    %1636 = vmatpush2.msra.mxu0 0.0
    %1637 = vmatprep.mubr.f32.mxu0 0.0
    %1638 = vmatmul.mubr.f32.gmra.mxu0 %v1571
    %v1639 = vpop.f32.mrf.mxu0
    %v1640 = vadd.f32 %v332, %v1639
    %v1641 = vpop.f32.mrf.mxu0
    %1642 = vdwg.mxu0
    %v1643 = vmul.f32 %v1640, %v223
    %v1644 = vtanh.pop %v1643
    %v1645 = vmul.f32 %v1644, %v223
    %v1646 = vadd.f32 %v1645, %v224
    %v1647 = vmul.f32 %v1646, %v1451
    %1649 = vrot.lane.b32.xlu0 %v1646, 64
    %v1650 = vpop.permute.xlu0 %1649
    %v1652 = vmul.f32 %v1646, %v1650
    %1654 = vrot.lane.b32.xlu0 %v1652, 32
    %v1655 = vpop.permute.xlu0 %1654
    %v1657 = vadd.f32 %v1647, %v1655
    %v1658 = vtanh.pop %v1657
    %1660 = vrot.lane.b32.xlu0 %v1658, 64
    %v1661 = vpop.permute.xlu0 %1660
    %v1663 = vmul.f32 %v1646, %v1661
    %1665 = vrot.lane.b32.xlu0 %v1663, 64
    %v1666 = vpop.permute.xlu0 %1665
    %1668 = vst.msk [vmem:[#allocation3] sm:$0xff] %vm432, %v1666
    %1669 = vrot.lane.b32.xlu0 %v1663, 32
    %v1670 = vpop.permute.xlu0 %1669
    %s1672 = scalar_lea.vmem [#allocation4], 48
    %1673 = vst.msk [vmem:[%s1672] sm:$0xff] %vm226, %v1670
    %s1674 = scalar_lea.vmem [#allocation2], 56
    %v1675 = vld [vmem:[%s1674] sm:$0xff]
    %v1676 = vsel %vm226, %v1566, 0
    %1678 = vmatprep.subr.mxu0 0.0
    %1679 = vmatpush1.msra.mxu0 0.0
    %1680 = vmatprep.subr.mxu0 0.0
    %1681 = vmatpush1.msra.mxu0 0.0
    %1682 = vmatprep.subr.mxu0 0.0
    %1683 = vmatpush1.msra.mxu0 0.0
    %1684 = vmatprep.subr.mxu0 0.0
    %1685 = vmatpush1.msra.mxu0 0.0
    %1686 = vmatprep.subr.mxu0 0.0
    %1687 = vmatpush1.msra.mxu0 0.0
    %1688 = vmatprep.subr.mxu0 0.0
    %1689 = vmatpush1.msra.mxu0 0.0
    %1690 = vmatprep.subr.mxu0 0.0
    %1691 = vmatpush1.msra.mxu0 0.0
    %1692 = vmatprep.subr.mxu0 0.0
    %1693 = vmatpush1.msra.mxu0 0.0
    %1694 = vmatprep.subr.mxu0 0.0
    %1695 = vmatpush1.msra.mxu0 0.0
    %1696 = vmatprep.subr.mxu0 0.0
    %1697 = vmatpush1.msra.mxu0 0.0
    %1698 = vmatprep.subr.mxu0 0.0
    %1699 = vmatpush1.msra.mxu0 0.0
    %1700 = vmatprep.subr.mxu0 0.0
    %1701 = vmatpush1.msra.mxu0 0.0
    %1702 = vmatprep.subr.mxu0 0.0
    %1703 = vmatpush1.msra.mxu0 %v206
    %1704 = vmatprep.subr.mxu0 0.0
    %1705 = vmatpush1.msra.mxu0 %v205
    %1706 = vmatprep.subr.mxu0 0.0
    %1707 = vmatpush1.msra.mxu0 %v204
    %1708 = vmatprep.subr.mxu0 0.0
    %1709 = vmatpush1.msra.mxu0 %v203
    %1710 = vmatprep.subr.mxu0 0.0
    %1711 = vmatpush2.msra.mxu0 0.0
    %1712 = vmatprep.subr.mxu0 0.0
    %1713 = vmatpush2.msra.mxu0 0.0
    %1714 = vmatprep.subr.mxu0 0.0
    %1715 = vmatpush2.msra.mxu0 0.0
    %1716 = vmatprep.subr.mxu0 0.0
    %1717 = vmatpush2.msra.mxu0 0.0
    %1718 = vmatprep.subr.mxu0 0.0
    %1719 = vmatpush2.msra.mxu0 0.0
    %1720 = vmatprep.subr.mxu0 0.0
    %1721 = vmatpush2.msra.mxu0 0.0
    %1722 = vmatprep.subr.mxu0 0.0
    %1723 = vmatpush2.msra.mxu0 0.0
    %1724 = vmatprep.subr.mxu0 0.0
    %1725 = vmatpush2.msra.mxu0 0.0
    %1726 = vmatprep.subr.mxu0 0.0
    %1727 = vmatpush2.msra.mxu0 0.0
    %1728 = vmatprep.subr.mxu0 0.0
    %1729 = vmatpush2.msra.mxu0 0.0
    %1730 = vmatprep.subr.mxu0 0.0
    %1731 = vmatpush2.msra.mxu0 0.0
    %1732 = vmatprep.subr.mxu0 0.0
    %1733 = vmatpush2.msra.mxu0 0.0
    %1734 = vmatprep.subr.mxu0 0.0
    %1735 = vmatpush2.msra.mxu0 0.0
    %1736 = vmatprep.subr.mxu0 0.0
    %1737 = vmatpush2.msra.mxu0 0.0
    %1738 = vmatprep.subr.mxu0 0.0
    %1739 = vmatpush2.msra.mxu0 0.0
    %1740 = vmatprep.subr.mxu0 0.0
    %1741 = vmatpush2.msra.mxu0 0.0
    %1742 = vmatprep.mubr.f32.mxu0 0.0
    %1743 = vmatmul.mubr.f32.gmra.mxu0 %v1676
    %v1744 = vpop.f32.mrf.mxu0
    %v1745 = vadd.f32 0.0, %v1744
    %v1746 = vpop.f32.mrf.mxu0
    %1747 = vdwg.mxu0
    %v1748 = vadd.f32 %v1675, %v1745
    %v1749 = vmul.f32 %v1748, %v223
    %v1750 = vtanh.pop %v1749
    %v1751 = vmul.f32 %v1750, %v223
    %v1752 = vadd.f32 %v1751, %v224
    %v1753 = vmul.f32 %v1752, %v1557
    %1755 = vrot.lane.b32.xlu0 %v1752, 64
    %v1756 = vpop.permute.xlu0 %1755
    %v1758 = vmul.f32 %v1752, %v1756
    %1760 = vrot.lane.b32.xlu0 %v1758, 32
    %v1761 = vpop.permute.xlu0 %1760
    %v1763 = vadd.f32 %v1753, %v1761
    %v1764 = vtanh.pop %v1763
    %1766 = vrot.lane.b32.xlu0 %v1764, 64
    %v1767 = vpop.permute.xlu0 %1766
    %v1769 = vmul.f32 %v1752, %v1767
    %1771 = vrot.lane.b32.xlu0 %v1769, 32
    %v1772 = vpop.permute.xlu0 %1771
    %1774 = vst.msk [vmem:[#allocation3] sm:$0xff] %vm226, %v1772
    %v1775 = vld [vmem:[#allocation3] sm:$0xff]
    %v1777 = vsel %vm216, %v1775, 0
    %1779 = vmatprep.subr.mxu0 0.0
    %1780 = vmatpush1.msra.mxu0 0.0
    %1781 = vmatprep.subr.mxu0 0.0
    %1782 = vmatpush1.msra.mxu0 0.0
    %1783 = vmatprep.subr.mxu0 0.0
    %1784 = vmatpush1.msra.mxu0 0.0
    %1785 = vmatprep.subr.mxu0 0.0
    %1786 = vmatpush1.msra.mxu0 0.0
    %1787 = vmatprep.subr.mxu0 0.0
    %1788 = vmatpush1.msra.mxu0 0.0
    %1789 = vmatprep.subr.mxu0 0.0
    %1790 = vmatpush1.msra.mxu0 0.0
    %1791 = vmatprep.subr.mxu0 0.0
    %1792 = vmatpush1.msra.mxu0 0.0
    %1793 = vmatprep.subr.mxu0 0.0
    %1794 = vmatpush1.msra.mxu0 0.0
    %1795 = vmatprep.subr.mxu0 0.0
    %1796 = vmatpush1.msra.mxu0 %v214
    %1797 = vmatprep.subr.mxu0 0.0
    %1798 = vmatpush1.msra.mxu0 %v213
    %1799 = vmatprep.subr.mxu0 0.0
    %1800 = vmatpush1.msra.mxu0 %v212
    %1801 = vmatprep.subr.mxu0 0.0
    %1802 = vmatpush1.msra.mxu0 %v211
    %1803 = vmatprep.subr.mxu0 0.0
    %1804 = vmatpush1.msra.mxu0 %v210
    %1805 = vmatprep.subr.mxu0 0.0
    %1806 = vmatpush1.msra.mxu0 %v209
    %1807 = vmatprep.subr.mxu0 0.0
    %1808 = vmatpush1.msra.mxu0 %v208
    %1809 = vmatprep.subr.mxu0 0.0
    %1810 = vmatpush1.msra.mxu0 %v207
    %1811 = vmatprep.subr.mxu0 0.0
    %1812 = vmatpush2.msra.mxu0 0.0
    %1813 = vmatprep.subr.mxu0 0.0
    %1814 = vmatpush2.msra.mxu0 0.0
    %1815 = vmatprep.subr.mxu0 0.0
    %1816 = vmatpush2.msra.mxu0 0.0
    %1817 = vmatprep.subr.mxu0 0.0
    %1818 = vmatpush2.msra.mxu0 0.0
    %1819 = vmatprep.subr.mxu0 0.0
    %1820 = vmatpush2.msra.mxu0 0.0
    %1821 = vmatprep.subr.mxu0 0.0
    %1822 = vmatpush2.msra.mxu0 0.0
    %1823 = vmatprep.subr.mxu0 0.0
    %1824 = vmatpush2.msra.mxu0 0.0
    %1825 = vmatprep.subr.mxu0 0.0
    %1826 = vmatpush2.msra.mxu0 0.0
    %1827 = vmatprep.subr.mxu0 0.0
    %1828 = vmatpush2.msra.mxu0 0.0
    %1829 = vmatprep.subr.mxu0 0.0
    %1830 = vmatpush2.msra.mxu0 0.0
    %1831 = vmatprep.subr.mxu0 0.0
    %1832 = vmatpush2.msra.mxu0 0.0
    %1833 = vmatprep.subr.mxu0 0.0
    %1834 = vmatpush2.msra.mxu0 0.0
    %1835 = vmatprep.subr.mxu0 0.0
    %1836 = vmatpush2.msra.mxu0 0.0
    %1837 = vmatprep.subr.mxu0 0.0
    %1838 = vmatpush2.msra.mxu0 0.0
    %1839 = vmatprep.subr.mxu0 0.0
    %1840 = vmatpush2.msra.mxu0 0.0
    %1841 = vmatprep.subr.mxu0 0.0
    %1842 = vmatpush2.msra.mxu0 0.0
    %1843 = vmatprep.mubr.f32.mxu0 0.0
    %1844 = vmatmul.mubr.f32.gmra.mxu0 %v1777
    %v1845 = vpop.f32.mrf.mxu0
    %v1846 = vadd.f32 %v332, %v1845
    %v1847 = vpop.f32.mrf.mxu0
    %1848 = vdwg.mxu0
    %v1849 = vmul.f32 %v1846, %v223
    %v1850 = vtanh.pop %v1849
    %v1851 = vmul.f32 %v1850, %v223
    %v1852 = vadd.f32 %v1851, %v224
    %v1853 = vmul.f32 %v1852, %v1657
    %1855 = vrot.lane.b32.xlu0 %v1852, 64
    %v1856 = vpop.permute.xlu0 %1855
    %v1858 = vmul.f32 %v1852, %v1856
    %1860 = vrot.lane.b32.xlu0 %v1858, 32
    %v1861 = vpop.permute.xlu0 %1860
    %v1863 = vadd.f32 %v1853, %v1861
    %v1864 = vtanh.pop %v1863
    %1866 = vrot.lane.b32.xlu0 %v1864, 64
    %v1867 = vpop.permute.xlu0 %1866
    %v1869 = vmul.f32 %v1852, %v1867
    %1871 = vrot.lane.b32.xlu0 %v1869, 64
    %v1872 = vpop.permute.xlu0 %1871
    %1874 = vst.msk [vmem:[#allocation3] sm:$0xff] %vm432, %v1872
    %1875 = vrot.lane.b32.xlu0 %v1869, 32
    %v1876 = vpop.permute.xlu0 %1875
    %s1878 = scalar_lea.vmem [#allocation4], 56
    %1879 = vst.msk [vmem:[%s1878] sm:$0xff] %vm226, %v1876
    %v1880 = vld [vmem:[%s6] sm:$0x1]
    %v1881 = vld [vmem:[#allocation4] sm:$0xff]
    %v1882 = vld [vmem:[#allocation4 + $0x8] sm:$0xff]
    %v1883 = vld [vmem:[#allocation4 + $0x10] sm:$0xff]
    %v1884 = vld [vmem:[#allocation4 + $0x18] sm:$0xff]
    %v1885 = vld [vmem:[#allocation4 + $0x20] sm:$0xff]
    %v1886 = vld [vmem:[#allocation4 + $0x28] sm:$0xff]
    %v1887 = vld [vmem:[#allocation4 + $0x30] sm:$0xff]
    %v1888 = vld [vmem:[#allocation4 + $0x38] sm:$0xff]
    %v1890 = vlaneseq
    %v1891 = vshrl.u32 %v1890, 7
    %v1892 = vsub.s32 0, %v1891
    %v1893 = vrot.slane %v1880, %v1892
    %v1895 = vmul.f32 %v1881, %v1893
    %v1896 = vmul.f32 %v1882, %v1893
    %v1897 = vmul.f32 %v1883, %v1893
    %v1898 = vmul.f32 %v1884, %v1893
    %v1899 = vmul.f32 %v1885, %v1893
    %v1900 = vmul.f32 %v1886, %v1893
    %v1901 = vmul.f32 %v1887, %v1893
    %v1902 = vmul.f32 %v1888, %v1893
    %v1903 = vsel %vm226, %v1895, 0.0
    %1904 = vadd.xlane.f32.xlu0 %v1903
    %v1905 = vpop.xlane.xlu0 %1904
    %v1906 = vsel %vm226, %v1896, 0.0
    %1907 = vadd.xlane.f32.xlu0 %v1906
    %v1908 = vpop.xlane.xlu0 %1907
    %v1909 = vsel %vm226, %v1897, 0.0
    %1910 = vadd.xlane.f32.xlu0 %v1909
    %v1911 = vpop.xlane.xlu0 %1910
    %v1912 = vsel %vm226, %v1898, 0.0
    %1913 = vadd.xlane.f32.xlu0 %v1912
    %v1914 = vpop.xlane.xlu0 %1913
    %v1915 = vsel %vm226, %v1899, 0.0
    %1916 = vadd.xlane.f32.xlu0 %v1915
    %v1917 = vpop.xlane.xlu0 %1916
    %v1918 = vsel %vm226, %v1900, 0.0
    %1919 = vadd.xlane.f32.xlu0 %v1918
    %v1920 = vpop.xlane.xlu0 %1919
    %v1921 = vsel %vm226, %v1901, 0.0
    %1922 = vadd.xlane.f32.xlu0 %v1921
    %v1923 = vpop.xlane.xlu0 %1922
    %v1924 = vsel %vm226, %v1902, 0.0
    %1925 = vadd.xlane.f32.xlu0 %v1924
    %v1926 = vpop.xlane.xlu0 %1925
    %s1927 = sld [smem:[#allocation5]]
    %v1928 = vstv %s1927
    %v1929 = vadd.f32 %v1905, %v1928
    %v1930 = vadd.f32 %v1908, %v1928
    %v1931 = vadd.f32 %v1911, %v1928
    %v1932 = vadd.f32 %v1914, %v1928
    %v1933 = vadd.f32 %v1917, %v1928
    %v1934 = vadd.f32 %v1920, %v1928
    %v1935 = vadd.f32 %v1923, %v1928
    %v1936 = vadd.f32 %v1926, %v1928
    %v1937 = vmax.f32 %v1929, 0.0
    %v1938 = vmax.f32 %v1930, 0.0
    %v1939 = vmax.f32 %v1931, 0.0
    %v1940 = vmax.f32 %v1932, 0.0
    %v1941 = vmax.f32 %v1933, 0.0
    %v1942 = vmax.f32 %v1934, 0.0
    %v1943 = vmax.f32 %v1935, 0.0
    %v1944 = vmax.f32 %v1936, 0.0
    %v1953 = vlaneseq
    %v1954 = vshrl.u32 %v1953, 7
    %v1955 = vsub.s32 %v219, %v1954
    %v1956 = vrot.slane %v1937, %v1955
    %v1957 = vlaneseq
    %v1958 = vshrl.u32 %v1957, 7
    %v1959 = vsub.s32 %v219, %v1958
    %v1960 = vrot.slane %v1938, %v1959
    %v1961 = vlaneseq
    %v1962 = vshrl.u32 %v1961, 7
    %v1963 = vsub.s32 %v219, %v1962
    %v1964 = vrot.slane %v1939, %v1963
    %v1965 = vlaneseq
    %v1966 = vshrl.u32 %v1965, 7
    %v1967 = vsub.s32 %v219, %v1966
    %v1968 = vrot.slane %v1940, %v1967
    %v1969 = vlaneseq
    %v1970 = vshrl.u32 %v1969, 7
    %v1971 = vsub.s32 %v219, %v1970
    %v1972 = vrot.slane %v1941, %v1971
    %v1973 = vlaneseq
    %v1974 = vshrl.u32 %v1973, 7
    %v1975 = vsub.s32 %v219, %v1974
    %v1976 = vrot.slane %v1942, %v1975
    %v1977 = vlaneseq
    %v1978 = vshrl.u32 %v1977, 7
    %v1979 = vsub.s32 %v219, %v1978
    %v1980 = vrot.slane %v1943, %v1979
    %v1981 = vlaneseq
    %v1982 = vshrl.u32 %v1981, 7
    %v1983 = vsub.s32 %v219, %v1982
    %v1984 = vrot.slane %v1944, %v1983
    %vm1985 = vcmask 1041409
    %v1986 = vsel %vm1985, %v1960, %v1956
    %vm1987 = vcmask 1042434
    %v1988 = vsel %vm1987, %v1964, %v1986
    %vm1989 = vcmask 1043459
    %v1990 = vsel %vm1989, %v1968, %v1988
    %vm1991 = vcmask 1044484
    %v1992 = vsel %vm1991, %v1972, %v1990
    %vm1993 = vcmask 1045509
    %v1994 = vsel %vm1993, %v1976, %v1992
    %vm1995 = vcmask 1046534
    %v1996 = vsel %vm1995, %v1980, %v1994
    %vm1997 = vcmask 1047559
    %v1998 = vsel %vm1997, %v1984, %v1996
    %vm2000 = vcmask 64512
    %2001 = vst.msk [vmem:[#allocation9] sm:$0xff] %vm2000, %v1998
    // Predicated region
    $region38: #{tpu_custom_call.1} parent=1 // pred_check
      _
    $region39: #{tpu_custom_call.1} parent=1 // pred_check_branch
      %2003 = sbr.rel (0) target = $region41
    $region40: #{tpu_custom_call.1} parent=1 // pred_region
      %s2005 = ssub.s32 128, 128
      %2006 = vsyncadd [#allocation8], %s2005
      %s2008 = sshll.u32 [#allocation9], 4
      %s2009 = int_to_ptr.vmem [resolvable:$true] %s2008
      %2011 = dma.vmem_to_hbm [thread:$0]  %s2009, 128, %s8, [#allocation8]
    $region41: #{tpu_custom_call.1} parent=1 // pred_fallthru
      _
    // Predicated region
    $region42: #{tpu_custom_call.1} parent=1 // pred_check
      _
    $region43: #{tpu_custom_call.1} parent=1 // pred_check_branch
      %2013 = sbr.rel (0) target = $region45
    $region44: #{tpu_custom_call.1} parent=1 // pred_region
      %2014 = dma.done [#allocation8], 128
    $region45: #{tpu_custom_call.1} parent=1 // pred_fallthru
      _
    %2015 = vsyncpa [#allocation7], 1
    %2016 = vsyncpa [#allocation8], 1

</llo_original>
